<compile_context>
chip_gen: v6e
topology: v6e:2x2x1
jax: 0.10.0
libtpu: 0.0.40
codegen_flags: <defaults>
</compile_context>

<pallas_src>
import functools

import jax
import jax.numpy as jnp
from jax import lax
from jax.experimental import pallas as pl
from jax.experimental.pallas import tpu as pltpu


def _block_kernel(x_ref, w_ref, g_ref, b_ref, o_ref, *, oh, ow, cin, eps):
    # x_ref: (1, 4, Hq, Wq, Cin) bf16 -- reflect-padded input split by (row, col) parity:
    #        x_ref[0, 2*i + j, m, q, c] == x_pad[2*m + i, 2*q + j, c]
    # w_ref: (16, Cin, CP) bf16  -- per-tap conv weights, Cout zero-padded to CP (mult of 128)
    # g_ref: (1, CP)  f32        -- InstanceNorm gamma (padded with 1)
    # b_ref: (1, CP)  f32        -- InstanceNorm beta  (padded with 0)
    # o_ref: (1, P, CP) f32      -- ReLU(InstanceNorm(conv)), P = OH*OW
    p_rows = oh * ow
    cp = o_ref.shape[-1]

    # Hoist the four parity planes once (each is re-sliced by 4 of the 16 taps).
    planes = [x_ref[0, t] for t in range(4)]                    # each (Hq, Wq, Cin) bf16

    acc = jnp.zeros((p_rows, cp), dtype=jnp.float32)
    for kh in range(4):
        i, a = kh % 2, kh // 2
        for kw in range(4):
            j, b = kw % 2, kw // 2
            # Contiguous static slice: rows [a, a+OH), cols [b, b+OW) of parity plane (i, j).
            xs = planes[i * 2 + j][a:a + oh, b:b + ow, :]       # (OH, OW, Cin) bf16
            # f32 hop keeps the (OH, OW, C) -> (P, C) fold layout-trivial (OW is a
            # multiple of the f32 sublane tile) before casting back for the bf16 dot.
            lhs = xs.astype(jnp.float32).reshape(p_rows, cin).astype(jnp.bfloat16)
            acc = acc + jnp.dot(lhs, w_ref[kh * 4 + kw],
                                preferred_element_type=jnp.float32)   # MXU, f32 accumulate

    # InstanceNorm2d stats in one sweep over the (P, CP) accumulator: E[x], E[x^2].
    inv_p = 1.0 / p_rows
    mean = jnp.sum(acc, axis=0, keepdims=True) * inv_p                # (1, CP)
    msq = jnp.sum(acc * acc, axis=0, keepdims=True) * inv_p
    var = jnp.maximum(msq - mean * mean, 0.0)
    inv_std = lax.rsqrt(var + eps)                                    # EUP slot

    scale = g_ref[...] * inv_std                                      # hoisted, (1, CP)
    shift = b_ref[...] - mean * scale
    y = acc * scale + shift                                           # affine InstanceNorm
    o_ref[0] = jnp.maximum(y, 0.0).astype(o_ref.dtype)                # ReLU


def block_forward(x, weight, gamma, beta, *, eps=1e-5):
    """x: (N, Cin, H, W) f32 NCHW. weight: (Cout, Cin, 4, 4). Returns (N, Cout, H//2, W//2)."""
    N, Cin, H, W = x.shape
    Cout = weight.shape[0]
    assert H % 2 == 0 and W % 2 == 0, "stride-2 conv expects even spatial dims"
    OH, OW = H // 2, W // 2
    P = OH * OW
    Hq, Wq = (H + 2) // 2, (W + 2) // 2
    CP = ((Cout + 127) // 128) * 128            # lane-dense channel padding

    # ---- index plumbing only (no data inflation) ----
    x_nhwc = jnp.transpose(x, (0, 2, 3, 1))
    x_pad = jnp.pad(x_nhwc, ((0, 0), (1, 1), (1, 1), (0, 0)), mode="reflect")
    # Split padded rows/cols by parity: x_r[n, 2i+j, m, q, c] = x_pad[n, 2m+i, 2q+j, c]
    x_r = x_pad.reshape(N, Hq, 2, Wq, 2, Cin)
    x_r = jnp.transpose(x_r, (0, 2, 4, 1, 3, 5)).reshape(N, 4, Hq, Wq, Cin)
    x_r = x_r.astype(jnp.bfloat16)              # halve input DMA bytes

    # weight (Cout, Cin, 4, 4) -> per-tap (16, Cin, CP), Cout zero-padded to CP.
    w_taps = jnp.transpose(weight, (2, 3, 1, 0)).reshape(16, Cin, Cout)
    w_taps = jnp.pad(w_taps, ((0, 0), (0, 0), (0, CP - Cout))).astype(jnp.bfloat16)
    g2d = jnp.pad(gamma.astype(jnp.float32), (0, CP - Cout), constant_values=1.0).reshape(1, CP)
    b2d = jnp.pad(beta.astype(jnp.float32), (0, CP - Cout)).reshape(1, CP)

    kernel = functools.partial(_block_kernel, oh=OH, ow=OW, cin=Cin, eps=eps)

    out = pl.pallas_call(
        kernel,
        out_shape=jax.ShapeDtypeStruct((N, P, CP), jnp.float32),
        grid_spec=pltpu.PrefetchScalarGridSpec(
            num_scalar_prefetch=0,
            grid=(N,),
            in_specs=[
                pl.BlockSpec((1, 4, Hq, Wq, Cin), lambda n: (n, 0, 0, 0, 0)),
                pl.BlockSpec((16, Cin, CP), lambda n: (0, 0, 0)),
                pl.BlockSpec((1, CP), lambda n: (0, 0)),
                pl.BlockSpec((1, CP), lambda n: (0, 0)),
            ],
            out_specs=pl.BlockSpec((1, P, CP), lambda n: (n, 0, 0)),
        ),
        compiler_params=pltpu.CompilerParams(
            dimension_semantics=("parallel",),      # batch axis -> v7x megacore sharding
            vmem_limit_bytes=32 * 1024 * 1024,      # safe on v5e/v6e/v7x
        ),
    )(x_r, w_taps, g2d, b2d)

    out = out[:, :, :Cout].reshape(N, OH, OW, Cout)
    return jnp.transpose(out, (0, 3, 1, 2))         # back to NCHW


def block_reference(x, weight, gamma, beta):
    """Pure-JAX f32 reference of the same PyTorch forward."""
    x_pad = jnp.pad(x, ((0, 0), (0, 0), (1, 1), (1, 1)), mode="reflect")
    conv = lax.conv_general_dilated(
        x_pad, weight, window_strides=(2, 2), padding="VALID",
        dimension_numbers=("NCHW", "OIHW", "NCHW"))
    mean = jnp.mean(conv, axis=(2, 3), keepdims=True)
    var = jnp.mean((conv - mean) ** 2, axis=(2, 3), keepdims=True)
    xhat = (conv - mean) * lax.rsqrt(var + 1e-5)
    y = xhat * gamma.reshape(1, -1, 1, 1) + beta.reshape(1, -1, 1, 1)
    return jnp.maximum(y, 0.0)


if __name__ == "__main__":
    key = jax.random.PRNGKey(0)
    k_x, k_w, k_g, k_b = jax.random.split(key, 4)

    N, Cin, H, W = 2, 4, 16, 16
    Cout = 8

    x = jax.random.normal(k_x, (N, Cin, H, W), dtype=jnp.float32)
    weight = jax.random.normal(k_w, (Cout, Cin, 4, 4), dtype=jnp.float32) * 0.1
    # Randomized affine params (instead of PyTorch's ones/zeros defaults) so the
    # gamma/beta broadcast path is actually exercised.
    gamma = 1.0 + 0.1 * jax.random.normal(k_g, (Cout,), dtype=jnp.float32)
    beta = 0.1 * jax.random.normal(k_b, (Cout,), dtype=jnp.float32)

    out = jax.block_until_ready(block_forward(x, weight, gamma, beta))
    ref = block_reference(x, weight, gamma, beta)

    assert out.shape == (N, Cout, H // 2, W // 2), out.shape
    max_err = float(jnp.max(jnp.abs(out - ref)))
    # bf16 matmul operands (f32 accumulate) -> loosened tolerance vs the pure-f32 reference.
    assert jnp.allclose(out, ref, atol=5e-2, rtol=5e-2), max_err

    # TODO(synk): down=False (Upsample+3x3 conv), LeakyReLU act, and Dropout(0.5) with
    # use_dropout=True are not implemented; the default Block config is covered.
    print("KERNEL_OK")
</pallas_src>

<mosaic_0001>
module attributes {stable_mosaic.version = 11 : i64} {
  func.func @_block_kernel(%arg0: i32, %arg1: memref<1x4x9x9x4xbf16, #tpu.memory_space<vmem>>, %arg2: memref<16x4x128xbf16, #tpu.memory_space<vmem>>, %arg3: memref<1x128xf32, #tpu.memory_space<vmem>>, %arg4: memref<1x128xf32, #tpu.memory_space<vmem>>, %arg5: memref<1x64x128xf32, #tpu.memory_space<vmem>>) attributes {dimension_semantics = [#tpu.dimension_semantics<parallel>], iteration_bounds = array<i64: 2>, scalar_prefetch = 0 : i64, scratch_operands = 0 : i64, tpu.core_type = #tpu.core_type<tc>, window_params = [{transform_indices = @transform_0, window_bounds = array<i64: 1, 4, 9, 9, 4>}, {pipeline_mode = #tpu.pipeline_mode<synchronous>, transform_indices = @transform_1, window_bounds = array<i64: 16, 4, 128>}, {pipeline_mode = #tpu.pipeline_mode<synchronous>, transform_indices = @transform_2, window_bounds = array<i64: 1, 128>}, {pipeline_mode = #tpu.pipeline_mode<synchronous>, transform_indices = @transform_3, window_bounds = array<i64: 1, 128>}, {transform_indices = @transform_4, window_bounds = array<i64: 1, 64, 128>}]} {
    %c0 = arith.constant 0 : index
    %c0_0 = arith.constant 0 : index
    %c0_1 = arith.constant 0 : index
    %c0_2 = arith.constant 0 : index
    %c0_3 = arith.constant 0 : index
    %0 = vector.load %arg1[%c0, %c0_0, %c0_1, %c0_2, %c0_3] : memref<1x4x9x9x4xbf16, #tpu.memory_space<vmem>>, vector<1x1x9x9x4xbf16>
    %1 = vector.shape_cast %0 : vector<1x1x9x9x4xbf16> to vector<9x9x4xbf16>
    %c0_4 = arith.constant 0 : index
    %c1 = arith.constant 1 : index
    %c0_5 = arith.constant 0 : index
    %c0_6 = arith.constant 0 : index
    %c0_7 = arith.constant 0 : index
    %2 = vector.load %arg1[%c0_4, %c1, %c0_5, %c0_6, %c0_7] : memref<1x4x9x9x4xbf16, #tpu.memory_space<vmem>>, vector<1x1x9x9x4xbf16>
    %3 = vector.shape_cast %2 : vector<1x1x9x9x4xbf16> to vector<9x9x4xbf16>
    %c0_8 = arith.constant 0 : index
    %c2 = arith.constant 2 : index
    %c0_9 = arith.constant 0 : index
    %c0_10 = arith.constant 0 : index
    %c0_11 = arith.constant 0 : index
    %4 = vector.load %arg1[%c0_8, %c2, %c0_9, %c0_10, %c0_11] : memref<1x4x9x9x4xbf16, #tpu.memory_space<vmem>>, vector<1x1x9x9x4xbf16>
    %5 = vector.shape_cast %4 : vector<1x1x9x9x4xbf16> to vector<9x9x4xbf16>
    %c0_12 = arith.constant 0 : index
    %c3 = arith.constant 3 : index
    %c0_13 = arith.constant 0 : index
    %c0_14 = arith.constant 0 : index
    %c0_15 = arith.constant 0 : index
    %6 = vector.load %arg1[%c0_12, %c3, %c0_13, %c0_14, %c0_15] : memref<1x4x9x9x4xbf16, #tpu.memory_space<vmem>>, vector<1x1x9x9x4xbf16>
    %7 = vector.shape_cast %6 : vector<1x1x9x9x4xbf16> to vector<9x9x4xbf16>
    %cst = arith.constant 0.000000e+00 : f32
    %8 = vector.broadcast %cst : f32 to vector<64x128xf32>
    %9 = vector.extract_strided_slice %1 {offsets = [0, 0, 0], sizes = [8, 8, 4], strides = [1, 1, 1]} : vector<9x9x4xbf16> to vector<8x8x4xbf16>
    %10 = arith.extf %9 : vector<8x8x4xbf16> to vector<8x8x4xf32>
    %11 = vector.shape_cast %10 : vector<8x8x4xf32> to vector<64x4xf32>
    %12 = arith.truncf %11 : vector<64x4xf32> to vector<64x4xbf16>
    %c0_16 = arith.constant 0 : index
    %c0_17 = arith.constant 0 : index
    %c0_18 = arith.constant 0 : index
    %13 = vector.load %arg2[%c0_16, %c0_17, %c0_18] : memref<16x4x128xbf16, #tpu.memory_space<vmem>>, vector<1x4x128xbf16>
    %14 = vector.shape_cast %13 : vector<1x4x128xbf16> to vector<4x128xbf16>
    %cst_19 = arith.constant dense<0.000000e+00> : vector<64x128xf32>
    %15 = tpu.matmul %12, %14, %cst_19 {dimension_numbers = #tpu.dot_dimension_numbers<[1], [0], [0], [1], [0, 0, 1, 1], [], []>} : vector<64x4xbf16>, vector<4x128xbf16>, vector<64x128xf32> -> vector<64x128xf32>
    %16 = arith.addf %8, %15 : vector<64x128xf32>
    %17 = vector.extract_strided_slice %3 {offsets = [0, 0, 0], sizes = [8, 8, 4], strides = [1, 1, 1]} : vector<9x9x4xbf16> to vector<8x8x4xbf16>
    %18 = arith.extf %17 : vector<8x8x4xbf16> to vector<8x8x4xf32>
    %19 = vector.shape_cast %18 : vector<8x8x4xf32> to vector<64x4xf32>
    %20 = arith.truncf %19 : vector<64x4xf32> to vector<64x4xbf16>
    %c1_20 = arith.constant 1 : index
    %c0_21 = arith.constant 0 : index
    %c0_22 = arith.constant 0 : index
    %21 = vector.load %arg2[%c1_20, %c0_21, %c0_22] : memref<16x4x128xbf16, #tpu.memory_space<vmem>>, vector<1x4x128xbf16>
    %22 = vector.shape_cast %21 : vector<1x4x128xbf16> to vector<4x128xbf16>
    %cst_23 = arith.constant dense<0.000000e+00> : vector<64x128xf32>
    %23 = tpu.matmul %20, %22, %cst_23 {dimension_numbers = #tpu.dot_dimension_numbers<[1], [0], [0], [1], [0, 0, 1, 1], [], []>} : vector<64x4xbf16>, vector<4x128xbf16>, vector<64x128xf32> -> vector<64x128xf32>
    %24 = arith.addf %16, %23 : vector<64x128xf32>
    %25 = vector.extract_strided_slice %1 {offsets = [0, 1, 0], sizes = [8, 8, 4], strides = [1, 1, 1]} : vector<9x9x4xbf16> to vector<8x8x4xbf16>
    %26 = arith.extf %25 : vector<8x8x4xbf16> to vector<8x8x4xf32>
    %27 = vector.shape_cast %26 : vector<8x8x4xf32> to vector<64x4xf32>
    %28 = arith.truncf %27 : vector<64x4xf32> to vector<64x4xbf16>
    %c2_24 = arith.constant 2 : index
    %c0_25 = arith.constant 0 : index
    %c0_26 = arith.constant 0 : index
    %29 = vector.load %arg2[%c2_24, %c0_25, %c0_26] : memref<16x4x128xbf16, #tpu.memory_space<vmem>>, vector<1x4x128xbf16>
    %30 = vector.shape_cast %29 : vector<1x4x128xbf16> to vector<4x128xbf16>
    %cst_27 = arith.constant dense<0.000000e+00> : vector<64x128xf32>
    %31 = tpu.matmul %28, %30, %cst_27 {dimension_numbers = #tpu.dot_dimension_numbers<[1], [0], [0], [1], [0, 0, 1, 1], [], []>} : vector<64x4xbf16>, vector<4x128xbf16>, vector<64x128xf32> -> vector<64x128xf32>
    %32 = arith.addf %24, %31 : vector<64x128xf32>
    %33 = vector.extract_strided_slice %3 {offsets = [0, 1, 0], sizes = [8, 8, 4], strides = [1, 1, 1]} : vector<9x9x4xbf16> to vector<8x8x4xbf16>
    %34 = arith.extf %33 : vector<8x8x4xbf16> to vector<8x8x4xf32>
    %35 = vector.shape_cast %34 : vector<8x8x4xf32> to vector<64x4xf32>
    %36 = arith.truncf %35 : vector<64x4xf32> to vector<64x4xbf16>
    %c3_28 = arith.constant 3 : index
    %c0_29 = arith.constant 0 : index
    %c0_30 = arith.constant 0 : index
    %37 = vector.load %arg2[%c3_28, %c0_29, %c0_30] : memref<16x4x128xbf16, #tpu.memory_space<vmem>>, vector<1x4x128xbf16>
    %38 = vector.shape_cast %37 : vector<1x4x128xbf16> to vector<4x128xbf16>
    %cst_31 = arith.constant dense<0.000000e+00> : vector<64x128xf32>
    %39 = tpu.matmul %36, %38, %cst_31 {dimension_numbers = #tpu.dot_dimension_numbers<[1], [0], [0], [1], [0, 0, 1, 1], [], []>} : vector<64x4xbf16>, vector<4x128xbf16>, vector<64x128xf32> -> vector<64x128xf32>
    %40 = arith.addf %32, %39 : vector<64x128xf32>
    %41 = vector.extract_strided_slice %5 {offsets = [0, 0, 0], sizes = [8, 8, 4], strides = [1, 1, 1]} : vector<9x9x4xbf16> to vector<8x8x4xbf16>
    %42 = arith.extf %41 : vector<8x8x4xbf16> to vector<8x8x4xf32>
    %43 = vector.shape_cast %42 : vector<8x8x4xf32> to vector<64x4xf32>
    %44 = arith.truncf %43 : vector<64x4xf32> to vector<64x4xbf16>
    %c4 = arith.constant 4 : index
    %c0_32 = arith.constant 0 : index
    %c0_33 = arith.constant 0 : index
    %45 = vector.load %arg2[%c4, %c0_32, %c0_33] : memref<16x4x128xbf16, #tpu.memory_space<vmem>>, vector<1x4x128xbf16>
    %46 = vector.shape_cast %45 : vector<1x4x128xbf16> to vector<4x128xbf16>
    %cst_34 = arith.constant dense<0.000000e+00> : vector<64x128xf32>
    %47 = tpu.matmul %44, %46, %cst_34 {dimension_numbers = #tpu.dot_dimension_numbers<[1], [0], [0], [1], [0, 0, 1, 1], [], []>} : vector<64x4xbf16>, vector<4x128xbf16>, vector<64x128xf32> -> vector<64x128xf32>
    %48 = arith.addf %40, %47 : vector<64x128xf32>
    %49 = vector.extract_strided_slice %7 {offsets = [0, 0, 0], sizes = [8, 8, 4], strides = [1, 1, 1]} : vector<9x9x4xbf16> to vector<8x8x4xbf16>
    %50 = arith.extf %49 : vector<8x8x4xbf16> to vector<8x8x4xf32>
    %51 = vector.shape_cast %50 : vector<8x8x4xf32> to vector<64x4xf32>
    %52 = arith.truncf %51 : vector<64x4xf32> to vector<64x4xbf16>
    %c5 = arith.constant 5 : index
    %c0_35 = arith.constant 0 : index
    %c0_36 = arith.constant 0 : index
    %53 = vector.load %arg2[%c5, %c0_35, %c0_36] : memref<16x4x128xbf16, #tpu.memory_space<vmem>>, vector<1x4x128xbf16>
    %54 = vector.shape_cast %53 : vector<1x4x128xbf16> to vector<4x128xbf16>
    %cst_37 = arith.constant dense<0.000000e+00> : vector<64x128xf32>
    %55 = tpu.matmul %52, %54, %cst_37 {dimension_numbers = #tpu.dot_dimension_numbers<[1], [0], [0], [1], [0, 0, 1, 1], [], []>} : vector<64x4xbf16>, vector<4x128xbf16>, vector<64x128xf32> -> vector<64x128xf32>
    %56 = arith.addf %48, %55 : vector<64x128xf32>
    %57 = vector.extract_strided_slice %5 {offsets = [0, 1, 0], sizes = [8, 8, 4], strides = [1, 1, 1]} : vector<9x9x4xbf16> to vector<8x8x4xbf16>
    %58 = arith.extf %57 : vector<8x8x4xbf16> to vector<8x8x4xf32>
    %59 = vector.shape_cast %58 : vector<8x8x4xf32> to vector<64x4xf32>
    %60 = arith.truncf %59 : vector<64x4xf32> to vector<64x4xbf16>
    %c6 = arith.constant 6 : index
    %c0_38 = arith.constant 0 : index
    %c0_39 = arith.constant 0 : index
    %61 = vector.load %arg2[%c6, %c0_38, %c0_39] : memref<16x4x128xbf16, #tpu.memory_space<vmem>>, vector<1x4x128xbf16>
    %62 = vector.shape_cast %61 : vector<1x4x128xbf16> to vector<4x128xbf16>
    %cst_40 = arith.constant dense<0.000000e+00> : vector<64x128xf32>
    %63 = tpu.matmul %60, %62, %cst_40 {dimension_numbers = #tpu.dot_dimension_numbers<[1], [0], [0], [1], [0, 0, 1, 1], [], []>} : vector<64x4xbf16>, vector<4x128xbf16>, vector<64x128xf32> -> vector<64x128xf32>
    %64 = arith.addf %56, %63 : vector<64x128xf32>
    %65 = vector.extract_strided_slice %7 {offsets = [0, 1, 0], sizes = [8, 8, 4], strides = [1, 1, 1]} : vector<9x9x4xbf16> to vector<8x8x4xbf16>
    %66 = arith.extf %65 : vector<8x8x4xbf16> to vector<8x8x4xf32>
    %67 = vector.shape_cast %66 : vector<8x8x4xf32> to vector<64x4xf32>
    %68 = arith.truncf %67 : vector<64x4xf32> to vector<64x4xbf16>
    %c7 = arith.constant 7 : index
    %c0_41 = arith.constant 0 : index
    %c0_42 = arith.constant 0 : index
    %69 = vector.load %arg2[%c7, %c0_41, %c0_42] : memref<16x4x128xbf16, #tpu.memory_space<vmem>>, vector<1x4x128xbf16>
    %70 = vector.shape_cast %69 : vector<1x4x128xbf16> to vector<4x128xbf16>
    %cst_43 = arith.constant dense<0.000000e+00> : vector<64x128xf32>
    %71 = tpu.matmul %68, %70, %cst_43 {dimension_numbers = #tpu.dot_dimension_numbers<[1], [0], [0], [1], [0, 0, 1, 1], [], []>} : vector<64x4xbf16>, vector<4x128xbf16>, vector<64x128xf32> -> vector<64x128xf32>
    %72 = arith.addf %64, %71 : vector<64x128xf32>
    %73 = vector.extract_strided_slice %1 {offsets = [1, 0, 0], sizes = [8, 8, 4], strides = [1, 1, 1]} : vector<9x9x4xbf16> to vector<8x8x4xbf16>
    %74 = arith.extf %73 : vector<8x8x4xbf16> to vector<8x8x4xf32>
    %75 = vector.shape_cast %74 : vector<8x8x4xf32> to vector<64x4xf32>
    %76 = arith.truncf %75 : vector<64x4xf32> to vector<64x4xbf16>
    %c8 = arith.constant 8 : index
    %c0_44 = arith.constant 0 : index
    %c0_45 = arith.constant 0 : index
    %77 = vector.load %arg2[%c8, %c0_44, %c0_45] : memref<16x4x128xbf16, #tpu.memory_space<vmem>>, vector<1x4x128xbf16>
    %78 = vector.shape_cast %77 : vector<1x4x128xbf16> to vector<4x128xbf16>
    %cst_46 = arith.constant dense<0.000000e+00> : vector<64x128xf32>
    %79 = tpu.matmul %76, %78, %cst_46 {dimension_numbers = #tpu.dot_dimension_numbers<[1], [0], [0], [1], [0, 0, 1, 1], [], []>} : vector<64x4xbf16>, vector<4x128xbf16>, vector<64x128xf32> -> vector<64x128xf32>
    %80 = arith.addf %72, %79 : vector<64x128xf32>
    %81 = vector.extract_strided_slice %3 {offsets = [1, 0, 0], sizes = [8, 8, 4], strides = [1, 1, 1]} : vector<9x9x4xbf16> to vector<8x8x4xbf16>
    %82 = arith.extf %81 : vector<8x8x4xbf16> to vector<8x8x4xf32>
    %83 = vector.shape_cast %82 : vector<8x8x4xf32> to vector<64x4xf32>
    %84 = arith.truncf %83 : vector<64x4xf32> to vector<64x4xbf16>
    %c9 = arith.constant 9 : index
    %c0_47 = arith.constant 0 : index
    %c0_48 = arith.constant 0 : index
    %85 = vector.load %arg2[%c9, %c0_47, %c0_48] : memref<16x4x128xbf16, #tpu.memory_space<vmem>>, vector<1x4x128xbf16>
    %86 = vector.shape_cast %85 : vector<1x4x128xbf16> to vector<4x128xbf16>
    %cst_49 = arith.constant dense<0.000000e+00> : vector<64x128xf32>
    %87 = tpu.matmul %84, %86, %cst_49 {dimension_numbers = #tpu.dot_dimension_numbers<[1], [0], [0], [1], [0, 0, 1, 1], [], []>} : vector<64x4xbf16>, vector<4x128xbf16>, vector<64x128xf32> -> vector<64x128xf32>
    %88 = arith.addf %80, %87 : vector<64x128xf32>
    %89 = vector.extract_strided_slice %1 {offsets = [1, 1, 0], sizes = [8, 8, 4], strides = [1, 1, 1]} : vector<9x9x4xbf16> to vector<8x8x4xbf16>
    %90 = arith.extf %89 : vector<8x8x4xbf16> to vector<8x8x4xf32>
    %91 = vector.shape_cast %90 : vector<8x8x4xf32> to vector<64x4xf32>
    %92 = arith.truncf %91 : vector<64x4xf32> to vector<64x4xbf16>
    %c10 = arith.constant 10 : index
    %c0_50 = arith.constant 0 : index
    %c0_51 = arith.constant 0 : index
    %93 = vector.load %arg2[%c10, %c0_50, %c0_51] : memref<16x4x128xbf16, #tpu.memory_space<vmem>>, vector<1x4x128xbf16>
    %94 = vector.shape_cast %93 : vector<1x4x128xbf16> to vector<4x128xbf16>
    %cst_52 = arith.constant dense<0.000000e+00> : vector<64x128xf32>
    %95 = tpu.matmul %92, %94, %cst_52 {dimension_numbers = #tpu.dot_dimension_numbers<[1], [0], [0], [1], [0, 0, 1, 1], [], []>} : vector<64x4xbf16>, vector<4x128xbf16>, vector<64x128xf32> -> vector<64x128xf32>
    %96 = arith.addf %88, %95 : vector<64x128xf32>
    %97 = vector.extract_strided_slice %3 {offsets = [1, 1, 0], sizes = [8, 8, 4], strides = [1, 1, 1]} : vector<9x9x4xbf16> to vector<8x8x4xbf16>
    %98 = arith.extf %97 : vector<8x8x4xbf16> to vector<8x8x4xf32>
    %99 = vector.shape_cast %98 : vector<8x8x4xf32> to vector<64x4xf32>
    %100 = arith.truncf %99 : vector<64x4xf32> to vector<64x4xbf16>
    %c11 = arith.constant 11 : index
    %c0_53 = arith.constant 0 : index
    %c0_54 = arith.constant 0 : index
    %101 = vector.load %arg2[%c11, %c0_53, %c0_54] : memref<16x4x128xbf16, #tpu.memory_space<vmem>>, vector<1x4x128xbf16>
    %102 = vector.shape_cast %101 : vector<1x4x128xbf16> to vector<4x128xbf16>
    %cst_55 = arith.constant dense<0.000000e+00> : vector<64x128xf32>
    %103 = tpu.matmul %100, %102, %cst_55 {dimension_numbers = #tpu.dot_dimension_numbers<[1], [0], [0], [1], [0, 0, 1, 1], [], []>} : vector<64x4xbf16>, vector<4x128xbf16>, vector<64x128xf32> -> vector<64x128xf32>
    %104 = arith.addf %96, %103 : vector<64x128xf32>
    %105 = vector.extract_strided_slice %5 {offsets = [1, 0, 0], sizes = [8, 8, 4], strides = [1, 1, 1]} : vector<9x9x4xbf16> to vector<8x8x4xbf16>
    %106 = arith.extf %105 : vector<8x8x4xbf16> to vector<8x8x4xf32>
    %107 = vector.shape_cast %106 : vector<8x8x4xf32> to vector<64x4xf32>
    %108 = arith.truncf %107 : vector<64x4xf32> to vector<64x4xbf16>
    %c12 = arith.constant 12 : index
    %c0_56 = arith.constant 0 : index
    %c0_57 = arith.constant 0 : index
    %109 = vector.load %arg2[%c12, %c0_56, %c0_57] : memref<16x4x128xbf16, #tpu.memory_space<vmem>>, vector<1x4x128xbf16>
    %110 = vector.shape_cast %109 : vector<1x4x128xbf16> to vector<4x128xbf16>
    %cst_58 = arith.constant dense<0.000000e+00> : vector<64x128xf32>
    %111 = tpu.matmul %108, %110, %cst_58 {dimension_numbers = #tpu.dot_dimension_numbers<[1], [0], [0], [1], [0, 0, 1, 1], [], []>} : vector<64x4xbf16>, vector<4x128xbf16>, vector<64x128xf32> -> vector<64x128xf32>
    %112 = arith.addf %104, %111 : vector<64x128xf32>
    %113 = vector.extract_strided_slice %7 {offsets = [1, 0, 0], sizes = [8, 8, 4], strides = [1, 1, 1]} : vector<9x9x4xbf16> to vector<8x8x4xbf16>
    %114 = arith.extf %113 : vector<8x8x4xbf16> to vector<8x8x4xf32>
    %115 = vector.shape_cast %114 : vector<8x8x4xf32> to vector<64x4xf32>
    %116 = arith.truncf %115 : vector<64x4xf32> to vector<64x4xbf16>
    %c13 = arith.constant 13 : index
    %c0_59 = arith.constant 0 : index
    %c0_60 = arith.constant 0 : index
    %117 = vector.load %arg2[%c13, %c0_59, %c0_60] : memref<16x4x128xbf16, #tpu.memory_space<vmem>>, vector<1x4x128xbf16>
    %118 = vector.shape_cast %117 : vector<1x4x128xbf16> to vector<4x128xbf16>
    %cst_61 = arith.constant dense<0.000000e+00> : vector<64x128xf32>
    %119 = tpu.matmul %116, %118, %cst_61 {dimension_numbers = #tpu.dot_dimension_numbers<[1], [0], [0], [1], [0, 0, 1, 1], [], []>} : vector<64x4xbf16>, vector<4x128xbf16>, vector<64x128xf32> -> vector<64x128xf32>
    %120 = arith.addf %112, %119 : vector<64x128xf32>
    %121 = vector.extract_strided_slice %5 {offsets = [1, 1, 0], sizes = [8, 8, 4], strides = [1, 1, 1]} : vector<9x9x4xbf16> to vector<8x8x4xbf16>
    %122 = arith.extf %121 : vector<8x8x4xbf16> to vector<8x8x4xf32>
    %123 = vector.shape_cast %122 : vector<8x8x4xf32> to vector<64x4xf32>
    %124 = arith.truncf %123 : vector<64x4xf32> to vector<64x4xbf16>
    %c14 = arith.constant 14 : index
    %c0_62 = arith.constant 0 : index
    %c0_63 = arith.constant 0 : index
    %125 = vector.load %arg2[%c14, %c0_62, %c0_63] : memref<16x4x128xbf16, #tpu.memory_space<vmem>>, vector<1x4x128xbf16>
    %126 = vector.shape_cast %125 : vector<1x4x128xbf16> to vector<4x128xbf16>
    %cst_64 = arith.constant dense<0.000000e+00> : vector<64x128xf32>
    %127 = tpu.matmul %124, %126, %cst_64 {dimension_numbers = #tpu.dot_dimension_numbers<[1], [0], [0], [1], [0, 0, 1, 1], [], []>} : vector<64x4xbf16>, vector<4x128xbf16>, vector<64x128xf32> -> vector<64x128xf32>
    %128 = arith.addf %120, %127 : vector<64x128xf32>
    %129 = vector.extract_strided_slice %7 {offsets = [1, 1, 0], sizes = [8, 8, 4], strides = [1, 1, 1]} : vector<9x9x4xbf16> to vector<8x8x4xbf16>
    %130 = arith.extf %129 : vector<8x8x4xbf16> to vector<8x8x4xf32>
    %131 = vector.shape_cast %130 : vector<8x8x4xf32> to vector<64x4xf32>
    %132 = arith.truncf %131 : vector<64x4xf32> to vector<64x4xbf16>
    %c15 = arith.constant 15 : index
    %c0_65 = arith.constant 0 : index
    %c0_66 = arith.constant 0 : index
    %133 = vector.load %arg2[%c15, %c0_65, %c0_66] : memref<16x4x128xbf16, #tpu.memory_space<vmem>>, vector<1x4x128xbf16>
    %134 = vector.shape_cast %133 : vector<1x4x128xbf16> to vector<4x128xbf16>
    %cst_67 = arith.constant dense<0.000000e+00> : vector<64x128xf32>
    %135 = tpu.matmul %132, %134, %cst_67 {dimension_numbers = #tpu.dot_dimension_numbers<[1], [0], [0], [1], [0, 0, 1, 1], [], []>} : vector<64x4xbf16>, vector<4x128xbf16>, vector<64x128xf32> -> vector<64x128xf32>
    %136 = arith.addf %128, %135 : vector<64x128xf32>
    %cst_68 = arith.constant dense<0.000000e+00> : vector<128xf32>
    %137 = vector.multi_reduction <add>, %136, %cst_68 [0] : vector<64x128xf32> to vector<128xf32>
    %138 = vector.shape_cast %137 : vector<128xf32> to vector<1x128xf32>
    %cst_69 = arith.constant 1.562500e-02 : f32
    %139 = vector.broadcast %cst_69 : f32 to vector<1x128xf32>
    %140 = arith.mulf %138, %139 : vector<1x128xf32>
    %141 = arith.mulf %136, %136 : vector<64x128xf32>
    %cst_70 = arith.constant dense<0.000000e+00> : vector<128xf32>
    %142 = vector.multi_reduction <add>, %141, %cst_70 [0] : vector<64x128xf32> to vector<128xf32>
    %143 = vector.shape_cast %142 : vector<128xf32> to vector<1x128xf32>
    %cst_71 = arith.constant 1.562500e-02 : f32
    %144 = vector.broadcast %cst_71 : f32 to vector<1x128xf32>
    %145 = arith.mulf %143, %144 : vector<1x128xf32>
    %146 = arith.mulf %140, %140 : vector<1x128xf32>
    %147 = arith.subf %145, %146 : vector<1x128xf32>
    %cst_72 = arith.constant 0.000000e+00 : f32
    %148 = vector.broadcast %cst_72 : f32 to vector<1x128xf32>
    %149 = arith.maximumf %147, %148 : vector<1x128xf32>
    %cst_73 = arith.constant 9.99999974E-6 : f32
    %150 = vector.broadcast %cst_73 : f32 to vector<1x128xf32>
    %151 = arith.addf %149, %150 : vector<1x128xf32>
    %152 = math.rsqrt %151 : vector<1x128xf32>
    %c0_74 = arith.constant 0 : index
    %c0_75 = arith.constant 0 : index
    %153 = vector.load %arg3[%c0_74, %c0_75] : memref<1x128xf32, #tpu.memory_space<vmem>>, vector<1x128xf32>
    %154 = arith.mulf %153, %152 : vector<1x128xf32>
    %c0_76 = arith.constant 0 : index
    %c0_77 = arith.constant 0 : index
    %155 = vector.load %arg4[%c0_76, %c0_77] : memref<1x128xf32, #tpu.memory_space<vmem>>, vector<1x128xf32>
    %156 = arith.mulf %140, %154 : vector<1x128xf32>
    %157 = arith.subf %155, %156 : vector<1x128xf32>
    %158 = vector.broadcast %154 : vector<1x128xf32> to vector<64x128xf32>
    %159 = arith.mulf %136, %158 : vector<64x128xf32>
    %160 = vector.broadcast %157 : vector<1x128xf32> to vector<64x128xf32>
    %161 = arith.addf %159, %160 : vector<64x128xf32>
    %cst_78 = arith.constant 0.000000e+00 : f32
    %162 = vector.broadcast %cst_78 : f32 to vector<64x128xf32>
    %163 = arith.maximumf %161, %162 : vector<64x128xf32>
    %c0_79 = arith.constant 0 : index
    %c0_80 = arith.constant 0 : index
    %c0_81 = arith.constant 0 : index
    %164 = vector.load %arg5[%c0_79, %c0_80, %c0_81] : memref<1x64x128xf32, #tpu.memory_space<vmem>>, vector<1x64x128xf32>
    %165 = vector.shape_cast %164 : vector<1x64x128xf32> to vector<64x128xf32>
    %166 = vector.shape_cast %163 : vector<64x128xf32> to vector<1x64x128xf32>
    tpu.vector_store %arg5[%c0_79, %c0_80, %c0_81], %166 {strides = array<i32>} : memref<1x64x128xf32, #tpu.memory_space<vmem>>, vector<1x64x128xf32>,
    return
  }
  func.func @transform_0(%arg0: i32) -> (i32, i32, i32, i32, i32) {
    %c0_i32 = arith.constant 0 : i32
    %c0_i32_0 = arith.constant 0 : i32
    %c0_i32_1 = arith.constant 0 : i32
    %c0_i32_2 = arith.constant 0 : i32
    %c0_i32_3 = arith.constant 0 : i32
    return %arg0, %c0_i32, %c0_i32_0, %c0_i32_1, %c0_i32_2 : i32, i32, i32, i32, i32
  }
  func.func @transform_1(%arg0: i32) -> (i32, i32, i32) {
    %c0_i32 = arith.constant 0 : i32
    %c0_i32_0 = arith.constant 0 : i32
    %c0_i32_1 = arith.constant 0 : i32
    %c0_i32_2 = arith.constant 0 : i32
    return %c0_i32, %c0_i32_0, %c0_i32_1 : i32, i32, i32
  }
  func.func @transform_2(%arg0: i32) -> (i32, i32) {
    %c0_i32 = arith.constant 0 : i32
    %c0_i32_0 = arith.constant 0 : i32
    %c0_i32_1 = arith.constant 0 : i32
    return %c0_i32, %c0_i32_0 : i32, i32
  }
  func.func @transform_3(%arg0: i32) -> (i32, i32) {
    %c0_i32 = arith.constant 0 : i32
    %c0_i32_0 = arith.constant 0 : i32
    %c0_i32_1 = arith.constant 0 : i32
    return %c0_i32, %c0_i32_0 : i32, i32
  }
  func.func @transform_4(%arg0: i32) -> (i32, i32, i32) {
    %c0_i32 = arith.constant 0 : i32
    %c0_i32_0 = arith.constant 0 : i32
    %c0_i32_1 = arith.constant 0 : i32
    return %arg0, %c0_i32, %c0_i32_0 : i32, i32, i32
  }
}

</mosaic_0001>

<llo_original>
// kernel: tpu_custom_call.1
$region0: #{tpu_custom_call.1}
  #allocation0 [shape = 'u32[]', space=smem, size = 0x4, offset = 0x4, fixed_abs, tag = 'smem constant byte address 0x4 - core index']
  #allocation1 [shape = 'u32[144,128]{1,0:T(1,128)}', space=vmem, size = 0x12000, scoped, tag = 'internal scratch']
  %s0 = inlined_call_operand.vmem [shape: bf16[2,4,9,9,4], index: 0, kind: input, shape index: {}]
  %s1 = inlined_call_operand.vmem [shape: bf16[16,4,128], index: 1, kind: input, shape index: {}]
  %s2 = inlined_call_operand.vmem [shape: f32[1,128], index: 2, kind: input, shape index: {}]
  %s3 = inlined_call_operand.vmem [shape: f32[1,128], index: 3, kind: input, shape index: {}]
  %s4 = inlined_call_operand.hbm [shape: f32[2,64,128], index: 4, kind: output, shape index: {}]
  %s5 = sld [smem:[#allocation0]]
  $region49: #{tpu_custom_call.1} parent=0
    _
  %s7 = ssub.s32 1, %s5
  %s8 = scalar_select 0, %s7, %s5
  $region1: #{tpu_custom_call.1} parent=0
    #allocation2 [shape = 'u8[65536]{0}', space=vmem, size = 0x10000, scoped, tag = 'output window, operand 0']
    #allocation3 [shape = 's32[2]{0}', space=sflag, size = 0x8, scoped, tag = 'scoped memory for tpu_custom_call.1']
    %9 = vsyncpa [#allocation3], 0
    %s10 = scalar_lea.sflag [#allocation3], 1
    %11 = vsyncpa %s10, 0
    loop: start=0, step=1, limit=4
    $region2: #{tpu_custom_call.1} parent=1 // loop_pre_header
      _
    $region3: #{tpu_custom_call.1} parent=1 // loop_header
      %s13 = sphi 0, %s17
      %p14 = scmp.ge.s32.totalorder %s13, 4
      %s23 = sphi 0, %s25
      %s26 = sphi 0, %s23
      %s27 = sphi 0, %s26
      %s43 = sphi 0, %s27
      %s47 = sphi 0, %s47
      %s49 = sphi 0, %s47
      %s50 = sphi 0, %s49
      %s64 = sphi 0, %s50
      %s68 = sphi 0, %s68
      %s70 = sphi 0, %s68
      %s71 = sphi 0, %s70
      %s85 = sphi 0, %s71
      %s89 = sphi 0, %s89
      %s91 = sphi 0, %s89
      %s92 = sphi 0, %s91
      %s106 = sphi 0, %s92
      %s112 = sphi 0, %s114
      %s115 = sphi 0, %s112
      %s116 = sphi 0, %s115
      %s132 = sphi 0, %s116
    $region4: #{tpu_custom_call.1} parent=1 // loop_header_branch
      %16 = sbr.rel (%p14) target = $region8
    $region5: #{tpu_custom_call.1} parent=1 // loop_body
      %s18 = ssub.s32 %s13, 1
      %s19 = ssub.s32 %s13, 2
      %s20 = sadd.s32 %s13, 1
      %s21 = ssub.s32 %s13, %s20
      %p22 = scmp.eq.s32.totalorder %s21, 0
      %s24 = sadd.s32 %s23, 1
      %s25 = scalar_select %p22, %s23, %s24
      %p28 = pneg %p22
      %p29 = scmp.eq.s32.totalorder %s13, 1
      %p30 = por %p28, %p29
      %p31 = scmp.ne.s32.totalorder %s23, %s26
      %p32 = scmp.eq.s32.totalorder %s13, 0
      %p33 = por %p31, %p32
      %p34 = scmp.ne.s32.totalorder %s23, %s26
      %p35 = scmp.eq.s32.totalorder %s18, 1
      %p36 = por %p34, %p35
      %p37 = scmp.ne.s32.totalorder %s26, %s27
      %p38 = scmp.eq.s32.totalorder %s18, 0
      %p39 = por %p37, %p38
      %p40 = scmp.ne.s32.totalorder %s26, %s27
      %p41 = scmp.eq.s32.totalorder %s19, 1
      %p42 = por %p40, %p41
      %p44 = scmp.ne.s32.totalorder %s27, %s43
      %p45 = scmp.eq.s32.totalorder %s19, 0
      %p46 = por %p44, %p45
      %s48 = sadd.s32 %s47, 1
      %p51 = scmp.eq.s32.totalorder %s13, 1
      %p52 = scmp.ne.s32.totalorder %s47, %s49
      %p53 = scmp.eq.s32.totalorder %s13, 0
      %p54 = por %p52, %p53
      %p55 = scmp.ne.s32.totalorder %s47, %s49
      %p56 = scmp.eq.s32.totalorder %s18, 1
      %p57 = por %p55, %p56
      %p58 = scmp.ne.s32.totalorder %s49, %s50
      %p59 = scmp.eq.s32.totalorder %s18, 0
      %p60 = por %p58, %p59
      %p61 = scmp.ne.s32.totalorder %s49, %s50
      %p62 = scmp.eq.s32.totalorder %s19, 1
      %p63 = por %p61, %p62
      %p65 = scmp.ne.s32.totalorder %s50, %s64
      %p66 = scmp.eq.s32.totalorder %s19, 0
      %p67 = por %p65, %p66
      %s69 = sadd.s32 %s68, 1
      %p72 = scmp.eq.s32.totalorder %s13, 1
      %p73 = scmp.ne.s32.totalorder %s68, %s70
      %p74 = scmp.eq.s32.totalorder %s13, 0
      %p75 = por %p73, %p74
      %p76 = scmp.ne.s32.totalorder %s68, %s70
      %p77 = scmp.eq.s32.totalorder %s18, 1
      %p78 = por %p76, %p77
      %p79 = scmp.ne.s32.totalorder %s70, %s71
      %p80 = scmp.eq.s32.totalorder %s18, 0
      %p81 = por %p79, %p80
      %p82 = scmp.ne.s32.totalorder %s70, %s71
      %p83 = scmp.eq.s32.totalorder %s19, 1
      %p84 = por %p82, %p83
      %p86 = scmp.ne.s32.totalorder %s71, %s85
      %p87 = scmp.eq.s32.totalorder %s19, 0
      %p88 = por %p86, %p87
      %s90 = sadd.s32 %s89, 1
      %p93 = scmp.eq.s32.totalorder %s13, 1
      %p94 = scmp.ne.s32.totalorder %s89, %s91
      %p95 = scmp.eq.s32.totalorder %s13, 0
      %p96 = por %p94, %p95
      %p97 = scmp.ne.s32.totalorder %s89, %s91
      %p98 = scmp.eq.s32.totalorder %s18, 1
      %p99 = por %p97, %p98
      %p100 = scmp.ne.s32.totalorder %s91, %s92
      %p101 = scmp.eq.s32.totalorder %s18, 0
      %p102 = por %p100, %p101
      %p103 = scmp.ne.s32.totalorder %s91, %s92
      %p104 = scmp.eq.s32.totalorder %s19, 1
      %p105 = por %p103, %p104
      %p107 = scmp.ne.s32.totalorder %s92, %s106
      %p108 = scmp.eq.s32.totalorder %s19, 0
      %p109 = por %p107, %p108
      %s110 = ssub.s32 %s13, %s20
      %p111 = scmp.eq.s32.totalorder %s110, 0
      %s113 = sadd.s32 %s112, 1
      %s114 = scalar_select %p111, %s112, %s113
      %p117 = pneg %p111
      %p118 = scmp.eq.s32.totalorder %s13, 1
      %p119 = por %p117, %p118
      %p120 = scmp.ne.s32.totalorder %s112, %s115
      %p121 = scmp.eq.s32.totalorder %s13, 0
      %p122 = por %p120, %p121
      %p123 = scmp.ne.s32.totalorder %s112, %s115
      %p124 = scmp.eq.s32.totalorder %s18, 1
      %p125 = por %p123, %p124
      %p126 = scmp.ne.s32.totalorder %s115, %s116
      %p127 = scmp.eq.s32.totalorder %s18, 0
      %p128 = por %p126, %p127
      %p129 = scmp.ne.s32.totalorder %s115, %s116
      %p130 = scmp.eq.s32.totalorder %s19, 1
      %p131 = por %p129, %p130
      %p133 = scmp.ne.s32.totalorder %s116, %s132
      %p134 = scmp.eq.s32.totalorder %s19, 0
      %p135 = por %p133, %p134
      %p136 = scmp.le.s32.totalorder 1, %s13
      %p137 = scmp.lt.s32.totalorder %s13, 3
      %p138 = pnand %p136, %p137
      %p139 = pneg %p138
      // Predicated region
      $region9: #{tpu_custom_call.1} parent=5 // pred_check
        _
      $region10: #{tpu_custom_call.1} parent=5 // pred_check_branch
        %141 = sbr.rel (%p138) target = $region12
      $region11: #{tpu_custom_call.1} parent=5 // pred_region
        %s142 = ssub.s32 %s13, 1
        // Predicated region
        $region13: #{tpu_custom_call.1} parent=11 // pred_check
          %p143 = pneg %p60
        $region14: #{tpu_custom_call.1} parent=11 // pred_check_branch
          %145 = sbr.rel (%p143) target = $region16
        $region15: #{tpu_custom_call.1} parent=11 // pred_region
          _
        $region16: #{tpu_custom_call.1} parent=11 // pred_fallthru
          _
        // Predicated region
        $region17: #{tpu_custom_call.1} parent=11 // pred_check
          %p146 = pneg %p81
        $region18: #{tpu_custom_call.1} parent=11 // pred_check_branch
          %148 = sbr.rel (%p146) target = $region20
        $region19: #{tpu_custom_call.1} parent=11 // pred_region
          _
        $region20: #{tpu_custom_call.1} parent=11 // pred_fallthru
          _
        // Predicated region
        $region21: #{tpu_custom_call.1} parent=11 // pred_check
          %p149 = pneg %p102
        $region22: #{tpu_custom_call.1} parent=11 // pred_check_branch
          %151 = sbr.rel (%p149) target = $region24
        $region23: #{tpu_custom_call.1} parent=11 // pred_region
          _
        $region24: #{tpu_custom_call.1} parent=11 // pred_fallthru
          _
      $region12: #{tpu_custom_call.1} parent=5 // pred_fallthru
        _
      %p152 = scmp.lt.s32.totalorder %s13, 2
      // Predicated region
      $region25: #{tpu_custom_call.1} parent=5 // pred_check
        %p153 = pneg %p152
      $region26: #{tpu_custom_call.1} parent=5 // pred_check_branch
        %155 = sbr.rel (%p153) target = $region28
      $region27: #{tpu_custom_call.1} parent=5 // pred_region
        // Predicated region
        $region29: #{tpu_custom_call.1} parent=27 // pred_check
          %p156 = pneg %p33
        $region30: #{tpu_custom_call.1} parent=27 // pred_check_branch
          %158 = sbr.rel (%p156) target = $region32
        $region31: #{tpu_custom_call.1} parent=27 // pred_region
          %p159 = scmp.lt.s32.totalorder %s13, 1
          %s160 = scalar_select %p159, %s13, 1
          %s161 = smul.addr %s160, 72
          %s162 = smul.addr %s161, 4
          %s163 = scalar_lea.vmem %s0, %s162
        $region32: #{tpu_custom_call.1} parent=27 // pred_fallthru
          _
      $region28: #{tpu_custom_call.1} parent=5 // pred_fallthru
        _
      %p164 = scmp.le.s32.totalorder 1, %s13
      %p165 = scmp.lt.s32.totalorder %s13, 3
      %p166 = pnand %p164, %p165
      %p167 = pneg %p166
      // Predicated region
      $region33: #{tpu_custom_call.1} parent=5 // pred_check
        _
      $region34: #{tpu_custom_call.1} parent=5 // pred_check_branch
        %169 = sbr.rel (%p166) target = $region36
      $region35: #{tpu_custom_call.1} parent=5 // pred_region
        %s170 = ssub.s32 %s13, 1
        %p171 = scmp.lt.s32.totalorder %s18, 1
        %s172 = scalar_select %p171, %s18, 1
        %s173 = smul.addr %s172, 72
        %s174 = smul.addr %s173, 4
        %s175 = scalar_lea.vmem %s0, %s174
        %p176 = pneg %p39
        %p177 = pneg %p36
        %p178 = pneg %p60
        %p179 = pneg %p57
        %p180 = pneg %p81
        %p181 = pneg %p78
        %p182 = pneg %p102
        %p183 = pneg %p99
        %p184 = pneg %p128
        %p185 = pneg %p125
        %s186 = sand.u32 %s115, 1
        %s187 = scalar_lea.sflag [#allocation3], %s186
        %s188 = sand.u32 %s115, 1
        %s189 = smul.addr %s188, 64
        %s190 = scalar_lea.vmem [#allocation2], %s189
        %p191 = scmp.lt.s32.totalorder %s18, 1
        %s192 = scalar_select %p191, %s18, 1
        %s193 = smul.addr %s192, 72
        %s194 = smul.addr %s193, 4
        %s195 = scalar_lea.vmem %s0, %s194
        %v197 = vld [vmem:[%s195] sm:$0xf]
        %v198 = vld [vmem:[%s195 + $0x4] sm:$0x1]
        %v199 = vld [vmem:[%s195 + $0x8] sm:$0xf]
        %v200 = vld [vmem:[%s195 + $0xc] sm:$0x1]
        %v201 = vld [vmem:[%s195 + $0x10] sm:$0xf]
        %v202 = vld [vmem:[%s195 + $0x14] sm:$0x1]
        %v203 = vld [vmem:[%s195 + $0x18] sm:$0xf]
        %v204 = vld [vmem:[%s195 + $0x1c] sm:$0x1]
        %v205 = vld [vmem:[%s195 + $0x20] sm:$0xf]
        %v206 = vld [vmem:[%s195 + $0x24] sm:$0x1]
        %v207 = vld [vmem:[%s195 + $0x28] sm:$0xf]
        %v208 = vld [vmem:[%s195 + $0x2c] sm:$0x1]
        %v209 = vld [vmem:[%s195 + $0x30] sm:$0xf]
        %v210 = vld [vmem:[%s195 + $0x34] sm:$0x1]
        %v211 = vld [vmem:[%s195 + $0x38] sm:$0xf]
        %v212 = vld [vmem:[%s195 + $0x3c] sm:$0x1]
        %v213 = vld [vmem:[%s195 + $0x40] sm:$0xf]
        %v214 = vld [vmem:[%s195 + $0x44] sm:$0x1]
        %s215 = scalar_lea.vmem %s195, 72
        %v216 = vld [vmem:[%s215] sm:$0xf]
        %v217 = vld [vmem:[%s215 + $0x4] sm:$0x1]
        %v218 = vld [vmem:[%s215 + $0x8] sm:$0xf]
        %v219 = vld [vmem:[%s215 + $0xc] sm:$0x1]
        %v220 = vld [vmem:[%s215 + $0x10] sm:$0xf]
        %v221 = vld [vmem:[%s215 + $0x14] sm:$0x1]
        %v222 = vld [vmem:[%s215 + $0x18] sm:$0xf]
        %v223 = vld [vmem:[%s215 + $0x1c] sm:$0x1]
        %v224 = vld [vmem:[%s215 + $0x20] sm:$0xf]
        %v225 = vld [vmem:[%s215 + $0x24] sm:$0x1]
        %v226 = vld [vmem:[%s215 + $0x28] sm:$0xf]
        %v227 = vld [vmem:[%s215 + $0x2c] sm:$0x1]
        %v228 = vld [vmem:[%s215 + $0x30] sm:$0xf]
        %v229 = vld [vmem:[%s215 + $0x34] sm:$0x1]
        %v230 = vld [vmem:[%s215 + $0x38] sm:$0xf]
        %v231 = vld [vmem:[%s215 + $0x3c] sm:$0x1]
        %v232 = vld [vmem:[%s215 + $0x40] sm:$0xf]
        %v233 = vld [vmem:[%s215 + $0x44] sm:$0x1]
        %s234 = scalar_lea.vmem %s195, 144
        %v235 = vld [vmem:[%s234] sm:$0xf]
        %v236 = vld [vmem:[%s234 + $0x4] sm:$0x1]
        %v237 = vld [vmem:[%s234 + $0x8] sm:$0xf]
        %v238 = vld [vmem:[%s234 + $0xc] sm:$0x1]
        %v239 = vld [vmem:[%s234 + $0x10] sm:$0xf]
        %v240 = vld [vmem:[%s234 + $0x14] sm:$0x1]
        %v241 = vld [vmem:[%s234 + $0x18] sm:$0xf]
        %v242 = vld [vmem:[%s234 + $0x1c] sm:$0x1]
        %v243 = vld [vmem:[%s234 + $0x20] sm:$0xf]
        %v244 = vld [vmem:[%s234 + $0x24] sm:$0x1]
        %v245 = vld [vmem:[%s234 + $0x28] sm:$0xf]
        %v246 = vld [vmem:[%s234 + $0x2c] sm:$0x1]
        %v247 = vld [vmem:[%s234 + $0x30] sm:$0xf]
        %v248 = vld [vmem:[%s234 + $0x34] sm:$0x1]
        %v249 = vld [vmem:[%s234 + $0x38] sm:$0xf]
        %v250 = vld [vmem:[%s234 + $0x3c] sm:$0x1]
        %v251 = vld [vmem:[%s234 + $0x40] sm:$0xf]
        %v252 = vld [vmem:[%s234 + $0x44] sm:$0x1]
        %s253 = scalar_lea.vmem %s195, 216
        %v254 = vld [vmem:[%s253] sm:$0xf]
        %v255 = vld [vmem:[%s253 + $0x4] sm:$0x1]
        %v256 = vld [vmem:[%s253 + $0x8] sm:$0xf]
        %v257 = vld [vmem:[%s253 + $0xc] sm:$0x1]
        %v258 = vld [vmem:[%s253 + $0x10] sm:$0xf]
        %v259 = vld [vmem:[%s253 + $0x14] sm:$0x1]
        %v260 = vld [vmem:[%s253 + $0x18] sm:$0xf]
        %v261 = vld [vmem:[%s253 + $0x1c] sm:$0x1]
        %v262 = vld [vmem:[%s253 + $0x20] sm:$0xf]
        %v263 = vld [vmem:[%s253 + $0x24] sm:$0x1]
        %v264 = vld [vmem:[%s253 + $0x28] sm:$0xf]
        %v265 = vld [vmem:[%s253 + $0x2c] sm:$0x1]
        %v266 = vld [vmem:[%s253 + $0x30] sm:$0xf]
        %v267 = vld [vmem:[%s253 + $0x34] sm:$0x1]
        %v268 = vld [vmem:[%s253 + $0x38] sm:$0xf]
        %v269 = vld [vmem:[%s253 + $0x3c] sm:$0x1]
        %v270 = vld [vmem:[%s253 + $0x40] sm:$0xf]
        %v271 = vld [vmem:[%s253 + $0x44] sm:$0x1]
        %v272 = vunpack.c.l.bf16 %v197
        %v273 = vunpack.c.l.bf16 %v199
        %v274 = vunpack.c.l.bf16 %v201
        %v275 = vunpack.c.l.bf16 %v203
        %v276 = vunpack.c.l.bf16 %v205
        %v277 = vunpack.c.l.bf16 %v207
        %v278 = vunpack.c.l.bf16 %v209
        %v279 = vunpack.c.l.bf16 %v211
        %v280 = vpack.c.bf16 %v273, %v272
        %v281 = vpack.c.bf16 %v275, %v274
        %v282 = vpack.c.bf16 %v277, %v276
        %v283 = vpack.c.bf16 %v279, %v278
        %v284 = vld [vmem:[%s1] sm:$0x3]
        %v285 = vunpack.c.l.bf16 %v216
        %v286 = vunpack.c.l.bf16 %v218
        %v287 = vunpack.c.l.bf16 %v220
        %v288 = vunpack.c.l.bf16 %v222
        %v289 = vunpack.c.l.bf16 %v224
        %v290 = vunpack.c.l.bf16 %v226
        %v291 = vunpack.c.l.bf16 %v228
        %v292 = vunpack.c.l.bf16 %v230
        %v293 = vpack.c.bf16 %v286, %v285
        %v294 = vpack.c.bf16 %v288, %v287
        %v295 = vpack.c.bf16 %v290, %v289
        %v296 = vpack.c.bf16 %v292, %v291
        %s297 = scalar_lea.vmem %s1, 2
        %v298 = vld [vmem:[%s297] sm:$0x3]
        %vm299 = vcmask 31744
        %v301 = vsel %vm299, %v293, 0
        %v304 = vsel %vm299, %v294, 0
        %v307 = vsel %vm299, %v295, 0
        %v310 = vsel %vm299, %v296, 0
        %vm312 = vcmask 1041408
        %v314 = vsel %vm312, %v298, 0
        %316 = vmatprep.subr.bf16.mxu0 0
        %317 = vmatpush1.bf16.msra.mxu0 0
        %318 = vmatprep.subr.bf16.mxu0 0
        %319 = vmatpush1.bf16.msra.mxu0 0
        %320 = vmatprep.subr.bf16.mxu0 0
        %321 = vmatpush1.bf16.msra.mxu0 0
        %322 = vmatprep.subr.bf16.mxu0 0
        %323 = vmatpush1.bf16.msra.mxu0 0
        %324 = vmatprep.subr.bf16.mxu0 0
        %325 = vmatpush1.bf16.msra.mxu0 0
        %326 = vmatprep.subr.bf16.mxu0 0
        %327 = vmatpush1.bf16.msra.mxu0 0
        %328 = vmatprep.subr.bf16.mxu0 0
        %329 = vmatpush1.bf16.msra.mxu0 0
        %330 = vmatprep.subr.bf16.mxu0 0
        %331 = vmatpush1.bf16.msra.mxu0 %v314
        %332 = vmatprep.subr.bf16.mxu0 0
        %333 = vmatpush2.bf16.msra.mxu0 0
        %334 = vmatprep.subr.bf16.mxu0 0
        %335 = vmatpush2.bf16.msra.mxu0 0
        %336 = vmatprep.subr.bf16.mxu0 0
        %337 = vmatpush2.bf16.msra.mxu0 0
        %338 = vmatprep.subr.bf16.mxu0 0
        %339 = vmatpush2.bf16.msra.mxu0 0
        %340 = vmatprep.subr.bf16.mxu0 0
        %341 = vmatpush2.bf16.msra.mxu0 0
        %342 = vmatprep.subr.bf16.mxu0 0
        %343 = vmatpush2.bf16.msra.mxu0 0
        %344 = vmatprep.subr.bf16.mxu0 0
        %345 = vmatpush2.bf16.msra.mxu0 0
        %346 = vmatprep.subr.bf16.mxu0 0
        %347 = vmatpush2.bf16.msra.mxu0 0
        %348 = vmatprep.mubr.bf16.mxu0 0
        %349 = vmatmul.mubr.bf16.gmra.mxu0 %v301
        %v350 = vpop.f32.mrf.mxu0
        %v351 = vadd.f32 0.0, %v350
        %v352 = vpop.f32.mrf.mxu0
        %v353 = vpop.f32.mrf.mxu0
        %v354 = vadd.f32 0.0, %v353
        %v355 = vpop.f32.mrf.mxu0
        %356 = vmatprep.mubr.bf16.mxu0 0
        %357 = vmatmul.mubr.bf16.gmra.mxu0 %v304
        %v358 = vpop.f32.mrf.mxu0
        %v359 = vadd.f32 0.0, %v358
        %v360 = vpop.f32.mrf.mxu0
        %v361 = vpop.f32.mrf.mxu0
        %v362 = vadd.f32 0.0, %v361
        %v363 = vpop.f32.mrf.mxu0
        %364 = vmatprep.mubr.bf16.mxu0 0
        %365 = vmatmul.mubr.bf16.gmra.mxu0 %v307
        %v366 = vpop.f32.mrf.mxu0
        %v367 = vadd.f32 0.0, %v366
        %v368 = vpop.f32.mrf.mxu0
        %v369 = vpop.f32.mrf.mxu0
        %v370 = vadd.f32 0.0, %v369
        %v371 = vpop.f32.mrf.mxu0
        %372 = vmatprep.mubr.bf16.mxu0 0
        %373 = vmatmul.mubr.bf16.gmra.mxu0 %v310
        %v374 = vpop.f32.mrf.mxu0
        %v375 = vadd.f32 0.0, %v374
        %v376 = vpop.f32.mrf.mxu0
        %v377 = vpop.f32.mrf.mxu0
        %v378 = vadd.f32 0.0, %v377
        %v379 = vpop.f32.mrf.mxu0
        %380 = vdwg.mxu0
        %v382 = vsel %vm299, %v280, 0
        %v385 = vsel %vm299, %v281, 0
        %v388 = vsel %vm299, %v282, 0
        %v391 = vsel %vm299, %v283, 0
        %v394 = vsel %vm312, %v284, 0
        %396 = vmatprep.subr.bf16.mxu0 0
        %397 = vmatpush1.bf16.msra.mxu0 0
        %398 = vmatprep.subr.bf16.mxu0 0
        %399 = vmatpush1.bf16.msra.mxu0 0
        %400 = vmatprep.subr.bf16.mxu0 0
        %401 = vmatpush1.bf16.msra.mxu0 0
        %402 = vmatprep.subr.bf16.mxu0 0
        %403 = vmatpush1.bf16.msra.mxu0 0
        %404 = vmatprep.subr.bf16.mxu0 0
        %405 = vmatpush1.bf16.msra.mxu0 0
        %406 = vmatprep.subr.bf16.mxu0 0
        %407 = vmatpush1.bf16.msra.mxu0 0
        %408 = vmatprep.subr.bf16.mxu0 0
        %409 = vmatpush1.bf16.msra.mxu0 0
        %410 = vmatprep.subr.bf16.mxu0 0
        %411 = vmatpush1.bf16.msra.mxu0 %v394
        %412 = vmatprep.subr.bf16.mxu0 0
        %413 = vmatpush2.bf16.msra.mxu0 0
        %414 = vmatprep.subr.bf16.mxu0 0
        %415 = vmatpush2.bf16.msra.mxu0 0
        %416 = vmatprep.subr.bf16.mxu0 0
        %417 = vmatpush2.bf16.msra.mxu0 0
        %418 = vmatprep.subr.bf16.mxu0 0
        %419 = vmatpush2.bf16.msra.mxu0 0
        %420 = vmatprep.subr.bf16.mxu0 0
        %421 = vmatpush2.bf16.msra.mxu0 0
        %422 = vmatprep.subr.bf16.mxu0 0
        %423 = vmatpush2.bf16.msra.mxu0 0
        %424 = vmatprep.subr.bf16.mxu0 0
        %425 = vmatpush2.bf16.msra.mxu0 0
        %426 = vmatprep.subr.bf16.mxu0 0
        %427 = vmatpush2.bf16.msra.mxu0 0
        %428 = vmatprep.mubr.bf16.mxu0 0
        %429 = vmatmul.mubr.bf16.gmra.mxu0 %v382
        %v430 = vpop.f32.mrf.mxu0
        %v431 = vadd.f32 %v351, %v430
        %v432 = vpop.f32.mrf.mxu0
        %v433 = vpop.f32.mrf.mxu0
        %v434 = vadd.f32 %v354, %v433
        %v435 = vpop.f32.mrf.mxu0
        %436 = vmatprep.mubr.bf16.mxu0 0
        %437 = vmatmul.mubr.bf16.gmra.mxu0 %v385
        %v438 = vpop.f32.mrf.mxu0
        %v439 = vadd.f32 %v359, %v438
        %v440 = vpop.f32.mrf.mxu0
        %v441 = vpop.f32.mrf.mxu0
        %v442 = vadd.f32 %v362, %v441
        %v443 = vpop.f32.mrf.mxu0
        %444 = vmatprep.mubr.bf16.mxu0 0
        %445 = vmatmul.mubr.bf16.gmra.mxu0 %v388
        %v446 = vpop.f32.mrf.mxu0
        %v447 = vadd.f32 %v367, %v446
        %v448 = vpop.f32.mrf.mxu0
        %v449 = vpop.f32.mrf.mxu0
        %v450 = vadd.f32 %v370, %v449
        %v451 = vpop.f32.mrf.mxu0
        %452 = vmatprep.mubr.bf16.mxu0 0
        %453 = vmatmul.mubr.bf16.gmra.mxu0 %v391
        %v454 = vpop.f32.mrf.mxu0
        %v455 = vadd.f32 %v375, %v454
        %v456 = vpop.f32.mrf.mxu0
        %v457 = vpop.f32.mrf.mxu0
        %v458 = vadd.f32 %v378, %v457
        %v459 = vpop.f32.mrf.mxu0
        %460 = vdwg.mxu0
        %v461 = vunpack.c.l.bf16 %v198
        %v462 = vunpack.c.l.bf16 %v200
        %v463 = vunpack.c.l.bf16 %v202
        %v464 = vunpack.c.l.bf16 %v204
        %v465 = vunpack.c.l.bf16 %v206
        %v466 = vunpack.c.l.bf16 %v208
        %v467 = vunpack.c.l.bf16 %v210
        %v468 = vunpack.c.l.bf16 %v212
        %vm485 = vcmask 1046528
        %v486 = vrot.slane %v272, 1
        %v487 = vrot.slane %v461, 1
        %v488 = vsel %vm485, %v486, %v487
        %v489 = vrot.slane %v273, 1
        %v490 = vrot.slane %v462, 1
        %v491 = vsel %vm485, %v489, %v490
        %v492 = vrot.slane %v274, 1
        %v493 = vrot.slane %v463, 1
        %v494 = vsel %vm485, %v492, %v493
        %v495 = vrot.slane %v275, 1
        %v496 = vrot.slane %v464, 1
        %v497 = vsel %vm485, %v495, %v496
        %v498 = vrot.slane %v276, 1
        %v499 = vrot.slane %v465, 1
        %v500 = vsel %vm485, %v498, %v499
        %v501 = vrot.slane %v277, 1
        %v502 = vrot.slane %v466, 1
        %v503 = vsel %vm485, %v501, %v502
        %v504 = vrot.slane %v278, 1
        %v505 = vrot.slane %v467, 1
        %v506 = vsel %vm485, %v504, %v505
        %v507 = vrot.slane %v279, 1
        %v508 = vrot.slane %v468, 1
        %v509 = vsel %vm485, %v507, %v508
        %v518 = vpack.c.bf16 %v491, %v488
        %v519 = vpack.c.bf16 %v497, %v494
        %v520 = vpack.c.bf16 %v503, %v500
        %v521 = vpack.c.bf16 %v509, %v506
        %s522 = scalar_lea.vmem %s1, 4
        %v523 = vld [vmem:[%s522] sm:$0x3]
        %v525 = vsel %vm299, %v518, 0
        %v528 = vsel %vm299, %v519, 0
        %v531 = vsel %vm299, %v520, 0
        %v534 = vsel %vm299, %v521, 0
        %v537 = vsel %vm312, %v523, 0
        %539 = vmatprep.subr.bf16.mxu0 0
        %540 = vmatpush1.bf16.msra.mxu0 0
        %541 = vmatprep.subr.bf16.mxu0 0
        %542 = vmatpush1.bf16.msra.mxu0 0
        %543 = vmatprep.subr.bf16.mxu0 0
        %544 = vmatpush1.bf16.msra.mxu0 0
        %545 = vmatprep.subr.bf16.mxu0 0
        %546 = vmatpush1.bf16.msra.mxu0 0
        %547 = vmatprep.subr.bf16.mxu0 0
        %548 = vmatpush1.bf16.msra.mxu0 0
        %549 = vmatprep.subr.bf16.mxu0 0
        %550 = vmatpush1.bf16.msra.mxu0 0
        %551 = vmatprep.subr.bf16.mxu0 0
        %552 = vmatpush1.bf16.msra.mxu0 0
        %553 = vmatprep.subr.bf16.mxu0 0
        %554 = vmatpush1.bf16.msra.mxu0 %v537
        %555 = vmatprep.subr.bf16.mxu0 0
        %556 = vmatpush2.bf16.msra.mxu0 0
        %557 = vmatprep.subr.bf16.mxu0 0
        %558 = vmatpush2.bf16.msra.mxu0 0
        %559 = vmatprep.subr.bf16.mxu0 0
        %560 = vmatpush2.bf16.msra.mxu0 0
        %561 = vmatprep.subr.bf16.mxu0 0
        %562 = vmatpush2.bf16.msra.mxu0 0
        %563 = vmatprep.subr.bf16.mxu0 0
        %564 = vmatpush2.bf16.msra.mxu0 0
        %565 = vmatprep.subr.bf16.mxu0 0
        %566 = vmatpush2.bf16.msra.mxu0 0
        %567 = vmatprep.subr.bf16.mxu0 0
        %568 = vmatpush2.bf16.msra.mxu0 0
        %569 = vmatprep.subr.bf16.mxu0 0
        %570 = vmatpush2.bf16.msra.mxu0 0
        %571 = vmatprep.mubr.bf16.mxu0 0
        %572 = vmatmul.mubr.bf16.gmra.mxu0 %v525
        %v573 = vpop.f32.mrf.mxu0
        %v574 = vadd.f32 0.0, %v573
        %v575 = vpop.f32.mrf.mxu0
        %v576 = vpop.f32.mrf.mxu0
        %v577 = vadd.f32 0.0, %v576
        %v578 = vpop.f32.mrf.mxu0
        %579 = vmatprep.mubr.bf16.mxu0 0
        %580 = vmatmul.mubr.bf16.gmra.mxu0 %v528
        %v581 = vpop.f32.mrf.mxu0
        %v582 = vadd.f32 0.0, %v581
        %v583 = vpop.f32.mrf.mxu0
        %v584 = vpop.f32.mrf.mxu0
        %v585 = vadd.f32 0.0, %v584
        %v586 = vpop.f32.mrf.mxu0
        %587 = vmatprep.mubr.bf16.mxu0 0
        %588 = vmatmul.mubr.bf16.gmra.mxu0 %v531
        %v589 = vpop.f32.mrf.mxu0
        %v590 = vadd.f32 0.0, %v589
        %v591 = vpop.f32.mrf.mxu0
        %v592 = vpop.f32.mrf.mxu0
        %v593 = vadd.f32 0.0, %v592
        %v594 = vpop.f32.mrf.mxu0
        %595 = vmatprep.mubr.bf16.mxu0 0
        %596 = vmatmul.mubr.bf16.gmra.mxu0 %v534
        %v597 = vpop.f32.mrf.mxu0
        %v598 = vadd.f32 0.0, %v597
        %v599 = vpop.f32.mrf.mxu0
        %v600 = vpop.f32.mrf.mxu0
        %v601 = vadd.f32 0.0, %v600
        %v602 = vpop.f32.mrf.mxu0
        %603 = vdwg.mxu0
        %v604 = vadd.f32 %v431, %v574
        %v605 = vadd.f32 %v434, %v577
        %v606 = vadd.f32 %v439, %v582
        %v607 = vadd.f32 %v442, %v585
        %v608 = vadd.f32 %v447, %v590
        %v609 = vadd.f32 %v450, %v593
        %v610 = vadd.f32 %v455, %v598
        %v611 = vadd.f32 %v458, %v601
        %v612 = vunpack.c.l.bf16 %v217
        %v613 = vunpack.c.l.bf16 %v219
        %v614 = vunpack.c.l.bf16 %v221
        %v615 = vunpack.c.l.bf16 %v223
        %v616 = vunpack.c.l.bf16 %v225
        %v617 = vunpack.c.l.bf16 %v227
        %v618 = vunpack.c.l.bf16 %v229
        %v619 = vunpack.c.l.bf16 %v231
        %v636 = vrot.slane %v285, 1
        %v637 = vrot.slane %v612, 1
        %v638 = vsel %vm485, %v636, %v637
        %v639 = vrot.slane %v286, 1
        %v640 = vrot.slane %v613, 1
        %v641 = vsel %vm485, %v639, %v640
        %v642 = vrot.slane %v287, 1
        %v643 = vrot.slane %v614, 1
        %v644 = vsel %vm485, %v642, %v643
        %v645 = vrot.slane %v288, 1
        %v646 = vrot.slane %v615, 1
        %v647 = vsel %vm485, %v645, %v646
        %v648 = vrot.slane %v289, 1
        %v649 = vrot.slane %v616, 1
        %v650 = vsel %vm485, %v648, %v649
        %v651 = vrot.slane %v290, 1
        %v652 = vrot.slane %v617, 1
        %v653 = vsel %vm485, %v651, %v652
        %v654 = vrot.slane %v291, 1
        %v655 = vrot.slane %v618, 1
        %v656 = vsel %vm485, %v654, %v655
        %v657 = vrot.slane %v292, 1
        %v658 = vrot.slane %v619, 1
        %v659 = vsel %vm485, %v657, %v658
        %v668 = vpack.c.bf16 %v641, %v638
        %v669 = vpack.c.bf16 %v647, %v644
        %v670 = vpack.c.bf16 %v653, %v650
        %v671 = vpack.c.bf16 %v659, %v656
        %s672 = scalar_lea.vmem %s1, 6
        %v673 = vld [vmem:[%s672] sm:$0x3]
        %v675 = vsel %vm299, %v668, 0
        %v678 = vsel %vm299, %v669, 0
        %v681 = vsel %vm299, %v670, 0
        %v684 = vsel %vm299, %v671, 0
        %v687 = vsel %vm312, %v673, 0
        %689 = vmatprep.subr.bf16.mxu0 0
        %690 = vmatpush1.bf16.msra.mxu0 0
        %691 = vmatprep.subr.bf16.mxu0 0
        %692 = vmatpush1.bf16.msra.mxu0 0
        %693 = vmatprep.subr.bf16.mxu0 0
        %694 = vmatpush1.bf16.msra.mxu0 0
        %695 = vmatprep.subr.bf16.mxu0 0
        %696 = vmatpush1.bf16.msra.mxu0 0
        %697 = vmatprep.subr.bf16.mxu0 0
        %698 = vmatpush1.bf16.msra.mxu0 0
        %699 = vmatprep.subr.bf16.mxu0 0
        %700 = vmatpush1.bf16.msra.mxu0 0
        %701 = vmatprep.subr.bf16.mxu0 0
        %702 = vmatpush1.bf16.msra.mxu0 0
        %703 = vmatprep.subr.bf16.mxu0 0
        %704 = vmatpush1.bf16.msra.mxu0 %v687
        %705 = vmatprep.subr.bf16.mxu0 0
        %706 = vmatpush2.bf16.msra.mxu0 0
        %707 = vmatprep.subr.bf16.mxu0 0
        %708 = vmatpush2.bf16.msra.mxu0 0
        %709 = vmatprep.subr.bf16.mxu0 0
        %710 = vmatpush2.bf16.msra.mxu0 0
        %711 = vmatprep.subr.bf16.mxu0 0
        %712 = vmatpush2.bf16.msra.mxu0 0
        %713 = vmatprep.subr.bf16.mxu0 0
        %714 = vmatpush2.bf16.msra.mxu0 0
        %715 = vmatprep.subr.bf16.mxu0 0
        %716 = vmatpush2.bf16.msra.mxu0 0
        %717 = vmatprep.subr.bf16.mxu0 0
        %718 = vmatpush2.bf16.msra.mxu0 0
        %719 = vmatprep.subr.bf16.mxu0 0
        %720 = vmatpush2.bf16.msra.mxu0 0
        %721 = vmatprep.mubr.bf16.mxu0 0
        %722 = vmatmul.mubr.bf16.gmra.mxu0 %v675
        %v723 = vpop.f32.mrf.mxu0
        %v724 = vadd.f32 0.0, %v723
        %v725 = vpop.f32.mrf.mxu0
        %v726 = vpop.f32.mrf.mxu0
        %v727 = vadd.f32 0.0, %v726
        %v728 = vpop.f32.mrf.mxu0
        %729 = vmatprep.mubr.bf16.mxu0 0
        %730 = vmatmul.mubr.bf16.gmra.mxu0 %v678
        %v731 = vpop.f32.mrf.mxu0
        %v732 = vadd.f32 0.0, %v731
        %v733 = vpop.f32.mrf.mxu0
        %v734 = vpop.f32.mrf.mxu0
        %v735 = vadd.f32 0.0, %v734
        %v736 = vpop.f32.mrf.mxu0
        %737 = vmatprep.mubr.bf16.mxu0 0
        %738 = vmatmul.mubr.bf16.gmra.mxu0 %v681
        %v739 = vpop.f32.mrf.mxu0
        %v740 = vadd.f32 0.0, %v739
        %v741 = vpop.f32.mrf.mxu0
        %v742 = vpop.f32.mrf.mxu0
        %v743 = vadd.f32 0.0, %v742
        %v744 = vpop.f32.mrf.mxu0
        %745 = vmatprep.mubr.bf16.mxu0 0
        %746 = vmatmul.mubr.bf16.gmra.mxu0 %v684
        %v747 = vpop.f32.mrf.mxu0
        %v748 = vadd.f32 0.0, %v747
        %v749 = vpop.f32.mrf.mxu0
        %v750 = vpop.f32.mrf.mxu0
        %v751 = vadd.f32 0.0, %v750
        %v752 = vpop.f32.mrf.mxu0
        %753 = vdwg.mxu0
        %v754 = vadd.f32 %v604, %v724
        %v755 = vadd.f32 %v605, %v727
        %v756 = vadd.f32 %v606, %v732
        %v757 = vadd.f32 %v607, %v735
        %v758 = vadd.f32 %v608, %v740
        %v759 = vadd.f32 %v609, %v743
        %v760 = vadd.f32 %v610, %v748
        %v761 = vadd.f32 %v611, %v751
        %v762 = vunpack.c.l.bf16 %v235
        %v763 = vunpack.c.l.bf16 %v237
        %v764 = vunpack.c.l.bf16 %v239
        %v765 = vunpack.c.l.bf16 %v241
        %v766 = vunpack.c.l.bf16 %v243
        %v767 = vunpack.c.l.bf16 %v245
        %v768 = vunpack.c.l.bf16 %v247
        %v769 = vunpack.c.l.bf16 %v249
        %v770 = vpack.c.bf16 %v763, %v762
        %v771 = vpack.c.bf16 %v765, %v764
        %v772 = vpack.c.bf16 %v767, %v766
        %v773 = vpack.c.bf16 %v769, %v768
        %s774 = scalar_lea.vmem %s1, 8
        %v775 = vld [vmem:[%s774] sm:$0x3]
        %v777 = vsel %vm299, %v770, 0
        %v780 = vsel %vm299, %v771, 0
        %v783 = vsel %vm299, %v772, 0
        %v786 = vsel %vm299, %v773, 0
        %v789 = vsel %vm312, %v775, 0
        %791 = vmatprep.subr.bf16.mxu0 0
        %792 = vmatpush1.bf16.msra.mxu0 0
        %793 = vmatprep.subr.bf16.mxu0 0
        %794 = vmatpush1.bf16.msra.mxu0 0
        %795 = vmatprep.subr.bf16.mxu0 0
        %796 = vmatpush1.bf16.msra.mxu0 0
        %797 = vmatprep.subr.bf16.mxu0 0
        %798 = vmatpush1.bf16.msra.mxu0 0
        %799 = vmatprep.subr.bf16.mxu0 0
        %800 = vmatpush1.bf16.msra.mxu0 0
        %801 = vmatprep.subr.bf16.mxu0 0
        %802 = vmatpush1.bf16.msra.mxu0 0
        %803 = vmatprep.subr.bf16.mxu0 0
        %804 = vmatpush1.bf16.msra.mxu0 0
        %805 = vmatprep.subr.bf16.mxu0 0
        %806 = vmatpush1.bf16.msra.mxu0 %v789
        %807 = vmatprep.subr.bf16.mxu0 0
        %808 = vmatpush2.bf16.msra.mxu0 0
        %809 = vmatprep.subr.bf16.mxu0 0
        %810 = vmatpush2.bf16.msra.mxu0 0
        %811 = vmatprep.subr.bf16.mxu0 0
        %812 = vmatpush2.bf16.msra.mxu0 0
        %813 = vmatprep.subr.bf16.mxu0 0
        %814 = vmatpush2.bf16.msra.mxu0 0
        %815 = vmatprep.subr.bf16.mxu0 0
        %816 = vmatpush2.bf16.msra.mxu0 0
        %817 = vmatprep.subr.bf16.mxu0 0
        %818 = vmatpush2.bf16.msra.mxu0 0
        %819 = vmatprep.subr.bf16.mxu0 0
        %820 = vmatpush2.bf16.msra.mxu0 0
        %821 = vmatprep.subr.bf16.mxu0 0
        %822 = vmatpush2.bf16.msra.mxu0 0
        %823 = vmatprep.mubr.bf16.mxu0 0
        %824 = vmatmul.mubr.bf16.gmra.mxu0 %v777
        %v825 = vpop.f32.mrf.mxu0
        %v826 = vadd.f32 0.0, %v825
        %v827 = vpop.f32.mrf.mxu0
        %v828 = vpop.f32.mrf.mxu0
        %v829 = vadd.f32 0.0, %v828
        %v830 = vpop.f32.mrf.mxu0
        %831 = vmatprep.mubr.bf16.mxu0 0
        %832 = vmatmul.mubr.bf16.gmra.mxu0 %v780
        %v833 = vpop.f32.mrf.mxu0
        %v834 = vadd.f32 0.0, %v833
        %v835 = vpop.f32.mrf.mxu0
        %v836 = vpop.f32.mrf.mxu0
        %v837 = vadd.f32 0.0, %v836
        %v838 = vpop.f32.mrf.mxu0
        %839 = vmatprep.mubr.bf16.mxu0 0
        %840 = vmatmul.mubr.bf16.gmra.mxu0 %v783
        %v841 = vpop.f32.mrf.mxu0
        %v842 = vadd.f32 0.0, %v841
        %v843 = vpop.f32.mrf.mxu0
        %v844 = vpop.f32.mrf.mxu0
        %v845 = vadd.f32 0.0, %v844
        %v846 = vpop.f32.mrf.mxu0
        %847 = vmatprep.mubr.bf16.mxu0 0
        %848 = vmatmul.mubr.bf16.gmra.mxu0 %v786
        %v849 = vpop.f32.mrf.mxu0
        %v850 = vadd.f32 0.0, %v849
        %v851 = vpop.f32.mrf.mxu0
        %v852 = vpop.f32.mrf.mxu0
        %v853 = vadd.f32 0.0, %v852
        %v854 = vpop.f32.mrf.mxu0
        %855 = vdwg.mxu0
        %v856 = vadd.f32 %v754, %v826
        %v857 = vadd.f32 %v755, %v829
        %v858 = vadd.f32 %v756, %v834
        %v859 = vadd.f32 %v757, %v837
        %v860 = vadd.f32 %v758, %v842
        %v861 = vadd.f32 %v759, %v845
        %v862 = vadd.f32 %v760, %v850
        %v863 = vadd.f32 %v761, %v853
        %v864 = vunpack.c.l.bf16 %v254
        %v865 = vunpack.c.l.bf16 %v256
        %v866 = vunpack.c.l.bf16 %v258
        %v867 = vunpack.c.l.bf16 %v260
        %v868 = vunpack.c.l.bf16 %v262
        %v869 = vunpack.c.l.bf16 %v264
        %v870 = vunpack.c.l.bf16 %v266
        %v871 = vunpack.c.l.bf16 %v268
        %v872 = vpack.c.bf16 %v865, %v864
        %v873 = vpack.c.bf16 %v867, %v866
        %v874 = vpack.c.bf16 %v869, %v868
        %v875 = vpack.c.bf16 %v871, %v870
        %s876 = scalar_lea.vmem %s1, 10
        %v877 = vld [vmem:[%s876] sm:$0x3]
        %v879 = vsel %vm299, %v872, 0
        %v882 = vsel %vm299, %v873, 0
        %v885 = vsel %vm299, %v874, 0
        %v888 = vsel %vm299, %v875, 0
        %v891 = vsel %vm312, %v877, 0
        %893 = vmatprep.subr.bf16.mxu0 0
        %894 = vmatpush1.bf16.msra.mxu0 0
        %895 = vmatprep.subr.bf16.mxu0 0
        %896 = vmatpush1.bf16.msra.mxu0 0
        %897 = vmatprep.subr.bf16.mxu0 0
        %898 = vmatpush1.bf16.msra.mxu0 0
        %899 = vmatprep.subr.bf16.mxu0 0
        %900 = vmatpush1.bf16.msra.mxu0 0
        %901 = vmatprep.subr.bf16.mxu0 0
        %902 = vmatpush1.bf16.msra.mxu0 0
        %903 = vmatprep.subr.bf16.mxu0 0
        %904 = vmatpush1.bf16.msra.mxu0 0
        %905 = vmatprep.subr.bf16.mxu0 0
        %906 = vmatpush1.bf16.msra.mxu0 0
        %907 = vmatprep.subr.bf16.mxu0 0
        %908 = vmatpush1.bf16.msra.mxu0 %v891
        %909 = vmatprep.subr.bf16.mxu0 0
        %910 = vmatpush2.bf16.msra.mxu0 0
        %911 = vmatprep.subr.bf16.mxu0 0
        %912 = vmatpush2.bf16.msra.mxu0 0
        %913 = vmatprep.subr.bf16.mxu0 0
        %914 = vmatpush2.bf16.msra.mxu0 0
        %915 = vmatprep.subr.bf16.mxu0 0
        %916 = vmatpush2.bf16.msra.mxu0 0
        %917 = vmatprep.subr.bf16.mxu0 0
        %918 = vmatpush2.bf16.msra.mxu0 0
        %919 = vmatprep.subr.bf16.mxu0 0
        %920 = vmatpush2.bf16.msra.mxu0 0
        %921 = vmatprep.subr.bf16.mxu0 0
        %922 = vmatpush2.bf16.msra.mxu0 0
        %923 = vmatprep.subr.bf16.mxu0 0
        %924 = vmatpush2.bf16.msra.mxu0 0
        %925 = vmatprep.mubr.bf16.mxu0 0
        %926 = vmatmul.mubr.bf16.gmra.mxu0 %v879
        %v927 = vpop.f32.mrf.mxu0
        %v928 = vadd.f32 0.0, %v927
        %v929 = vpop.f32.mrf.mxu0
        %v930 = vpop.f32.mrf.mxu0
        %v931 = vadd.f32 0.0, %v930
        %v932 = vpop.f32.mrf.mxu0
        %933 = vmatprep.mubr.bf16.mxu0 0
        %934 = vmatmul.mubr.bf16.gmra.mxu0 %v882
        %v935 = vpop.f32.mrf.mxu0
        %v936 = vadd.f32 0.0, %v935
        %v937 = vpop.f32.mrf.mxu0
        %v938 = vpop.f32.mrf.mxu0
        %v939 = vadd.f32 0.0, %v938
        %v940 = vpop.f32.mrf.mxu0
        %941 = vmatprep.mubr.bf16.mxu0 0
        %942 = vmatmul.mubr.bf16.gmra.mxu0 %v885
        %v943 = vpop.f32.mrf.mxu0
        %v944 = vadd.f32 0.0, %v943
        %v945 = vpop.f32.mrf.mxu0
        %v946 = vpop.f32.mrf.mxu0
        %v947 = vadd.f32 0.0, %v946
        %v948 = vpop.f32.mrf.mxu0
        %949 = vmatprep.mubr.bf16.mxu0 0
        %950 = vmatmul.mubr.bf16.gmra.mxu0 %v888
        %v951 = vpop.f32.mrf.mxu0
        %v952 = vadd.f32 0.0, %v951
        %v953 = vpop.f32.mrf.mxu0
        %v954 = vpop.f32.mrf.mxu0
        %v955 = vadd.f32 0.0, %v954
        %v956 = vpop.f32.mrf.mxu0
        %957 = vdwg.mxu0
        %v958 = vadd.f32 %v856, %v928
        %v959 = vadd.f32 %v857, %v931
        %v960 = vadd.f32 %v858, %v936
        %v961 = vadd.f32 %v859, %v939
        %v962 = vadd.f32 %v860, %v944
        %v963 = vadd.f32 %v861, %v947
        %v964 = vadd.f32 %v862, %v952
        %v965 = vadd.f32 %v863, %v955
        %v966 = vunpack.c.l.bf16 %v236
        %v967 = vunpack.c.l.bf16 %v238
        %v968 = vunpack.c.l.bf16 %v240
        %v969 = vunpack.c.l.bf16 %v242
        %v970 = vunpack.c.l.bf16 %v244
        %v971 = vunpack.c.l.bf16 %v246
        %v972 = vunpack.c.l.bf16 %v248
        %v973 = vunpack.c.l.bf16 %v250
        %v990 = vrot.slane %v762, 1
        %v991 = vrot.slane %v966, 1
        %v992 = vsel %vm485, %v990, %v991
        %v993 = vrot.slane %v763, 1
        %v994 = vrot.slane %v967, 1
        %v995 = vsel %vm485, %v993, %v994
        %v996 = vrot.slane %v764, 1
        %v997 = vrot.slane %v968, 1
        %v998 = vsel %vm485, %v996, %v997
        %v999 = vrot.slane %v765, 1
        %v1000 = vrot.slane %v969, 1
        %v1001 = vsel %vm485, %v999, %v1000
        %v1002 = vrot.slane %v766, 1
        %v1003 = vrot.slane %v970, 1
        %v1004 = vsel %vm485, %v1002, %v1003
        %v1005 = vrot.slane %v767, 1
        %v1006 = vrot.slane %v971, 1
        %v1007 = vsel %vm485, %v1005, %v1006
        %v1008 = vrot.slane %v768, 1
        %v1009 = vrot.slane %v972, 1
        %v1010 = vsel %vm485, %v1008, %v1009
        %v1011 = vrot.slane %v769, 1
        %v1012 = vrot.slane %v973, 1
        %v1013 = vsel %vm485, %v1011, %v1012
        %v1022 = vpack.c.bf16 %v995, %v992
        %v1023 = vpack.c.bf16 %v1001, %v998
        %v1024 = vpack.c.bf16 %v1007, %v1004
        %v1025 = vpack.c.bf16 %v1013, %v1010
        %s1026 = scalar_lea.vmem %s1, 12
        %v1027 = vld [vmem:[%s1026] sm:$0x3]
        %v1029 = vsel %vm299, %v1022, 0
        %v1032 = vsel %vm299, %v1023, 0
        %v1035 = vsel %vm299, %v1024, 0
        %v1038 = vsel %vm299, %v1025, 0
        %v1041 = vsel %vm312, %v1027, 0
        %1043 = vmatprep.subr.bf16.mxu0 0
        %1044 = vmatpush1.bf16.msra.mxu0 0
        %1045 = vmatprep.subr.bf16.mxu0 0
        %1046 = vmatpush1.bf16.msra.mxu0 0
        %1047 = vmatprep.subr.bf16.mxu0 0
        %1048 = vmatpush1.bf16.msra.mxu0 0
        %1049 = vmatprep.subr.bf16.mxu0 0
        %1050 = vmatpush1.bf16.msra.mxu0 0
        %1051 = vmatprep.subr.bf16.mxu0 0
        %1052 = vmatpush1.bf16.msra.mxu0 0
        %1053 = vmatprep.subr.bf16.mxu0 0
        %1054 = vmatpush1.bf16.msra.mxu0 0
        %1055 = vmatprep.subr.bf16.mxu0 0
        %1056 = vmatpush1.bf16.msra.mxu0 0
        %1057 = vmatprep.subr.bf16.mxu0 0
        %1058 = vmatpush1.bf16.msra.mxu0 %v1041
        %1059 = vmatprep.subr.bf16.mxu0 0
        %1060 = vmatpush2.bf16.msra.mxu0 0
        %1061 = vmatprep.subr.bf16.mxu0 0
        %1062 = vmatpush2.bf16.msra.mxu0 0
        %1063 = vmatprep.subr.bf16.mxu0 0
        %1064 = vmatpush2.bf16.msra.mxu0 0
        %1065 = vmatprep.subr.bf16.mxu0 0
        %1066 = vmatpush2.bf16.msra.mxu0 0
        %1067 = vmatprep.subr.bf16.mxu0 0
        %1068 = vmatpush2.bf16.msra.mxu0 0
        %1069 = vmatprep.subr.bf16.mxu0 0
        %1070 = vmatpush2.bf16.msra.mxu0 0
        %1071 = vmatprep.subr.bf16.mxu0 0
        %1072 = vmatpush2.bf16.msra.mxu0 0
        %1073 = vmatprep.subr.bf16.mxu0 0
        %1074 = vmatpush2.bf16.msra.mxu0 0
        %1075 = vmatprep.mubr.bf16.mxu0 0
        %1076 = vmatmul.mubr.bf16.gmra.mxu0 %v1029
        %v1077 = vpop.f32.mrf.mxu0
        %v1078 = vadd.f32 0.0, %v1077
        %v1079 = vpop.f32.mrf.mxu0
        %v1080 = vpop.f32.mrf.mxu0
        %v1081 = vadd.f32 0.0, %v1080
        %v1082 = vpop.f32.mrf.mxu0
        %1083 = vmatprep.mubr.bf16.mxu0 0
        %1084 = vmatmul.mubr.bf16.gmra.mxu0 %v1032
        %v1085 = vpop.f32.mrf.mxu0
        %v1086 = vadd.f32 0.0, %v1085
        %v1087 = vpop.f32.mrf.mxu0
        %v1088 = vpop.f32.mrf.mxu0
        %v1089 = vadd.f32 0.0, %v1088
        %v1090 = vpop.f32.mrf.mxu0
        %1091 = vmatprep.mubr.bf16.mxu0 0
        %1092 = vmatmul.mubr.bf16.gmra.mxu0 %v1035
        %v1093 = vpop.f32.mrf.mxu0
        %v1094 = vadd.f32 0.0, %v1093
        %v1095 = vpop.f32.mrf.mxu0
        %v1096 = vpop.f32.mrf.mxu0
        %v1097 = vadd.f32 0.0, %v1096
        %v1098 = vpop.f32.mrf.mxu0
        %1099 = vmatprep.mubr.bf16.mxu0 0
        %1100 = vmatmul.mubr.bf16.gmra.mxu0 %v1038
        %v1101 = vpop.f32.mrf.mxu0
        %v1102 = vadd.f32 0.0, %v1101
        %v1103 = vpop.f32.mrf.mxu0
        %v1104 = vpop.f32.mrf.mxu0
        %v1105 = vadd.f32 0.0, %v1104
        %v1106 = vpop.f32.mrf.mxu0
        %1107 = vdwg.mxu0
        %v1108 = vadd.f32 %v958, %v1078
        %v1109 = vadd.f32 %v959, %v1081
        %v1110 = vadd.f32 %v960, %v1086
        %v1111 = vadd.f32 %v961, %v1089
        %v1112 = vadd.f32 %v962, %v1094
        %v1113 = vadd.f32 %v963, %v1097
        %v1114 = vadd.f32 %v964, %v1102
        %v1115 = vadd.f32 %v965, %v1105
        %v1116 = vunpack.c.l.bf16 %v255
        %v1117 = vunpack.c.l.bf16 %v257
        %v1118 = vunpack.c.l.bf16 %v259
        %v1119 = vunpack.c.l.bf16 %v261
        %v1120 = vunpack.c.l.bf16 %v263
        %v1121 = vunpack.c.l.bf16 %v265
        %v1122 = vunpack.c.l.bf16 %v267
        %v1123 = vunpack.c.l.bf16 %v269
        %v1140 = vrot.slane %v864, 1
        %v1141 = vrot.slane %v1116, 1
        %v1142 = vsel %vm485, %v1140, %v1141
        %v1143 = vrot.slane %v865, 1
        %v1144 = vrot.slane %v1117, 1
        %v1145 = vsel %vm485, %v1143, %v1144
        %v1146 = vrot.slane %v866, 1
        %v1147 = vrot.slane %v1118, 1
        %v1148 = vsel %vm485, %v1146, %v1147
        %v1149 = vrot.slane %v867, 1
        %v1150 = vrot.slane %v1119, 1
        %v1151 = vsel %vm485, %v1149, %v1150
        %v1152 = vrot.slane %v868, 1
        %v1153 = vrot.slane %v1120, 1
        %v1154 = vsel %vm485, %v1152, %v1153
        %v1155 = vrot.slane %v869, 1
        %v1156 = vrot.slane %v1121, 1
        %v1157 = vsel %vm485, %v1155, %v1156
        %v1158 = vrot.slane %v870, 1
        %v1159 = vrot.slane %v1122, 1
        %v1160 = vsel %vm485, %v1158, %v1159
        %v1161 = vrot.slane %v871, 1
        %v1162 = vrot.slane %v1123, 1
        %v1163 = vsel %vm485, %v1161, %v1162
        %v1172 = vpack.c.bf16 %v1145, %v1142
        %v1173 = vpack.c.bf16 %v1151, %v1148
        %v1174 = vpack.c.bf16 %v1157, %v1154
        %v1175 = vpack.c.bf16 %v1163, %v1160
        %s1176 = scalar_lea.vmem %s1, 14
        %v1177 = vld [vmem:[%s1176] sm:$0x3]
        %v1179 = vsel %vm299, %v1172, 0
        %v1182 = vsel %vm299, %v1173, 0
        %v1185 = vsel %vm299, %v1174, 0
        %v1188 = vsel %vm299, %v1175, 0
        %v1191 = vsel %vm312, %v1177, 0
        %1193 = vmatprep.subr.bf16.mxu0 0
        %1194 = vmatpush1.bf16.msra.mxu0 0
        %1195 = vmatprep.subr.bf16.mxu0 0
        %1196 = vmatpush1.bf16.msra.mxu0 0
        %1197 = vmatprep.subr.bf16.mxu0 0
        %1198 = vmatpush1.bf16.msra.mxu0 0
        %1199 = vmatprep.subr.bf16.mxu0 0
        %1200 = vmatpush1.bf16.msra.mxu0 0
        %1201 = vmatprep.subr.bf16.mxu0 0
        %1202 = vmatpush1.bf16.msra.mxu0 0
        %1203 = vmatprep.subr.bf16.mxu0 0
        %1204 = vmatpush1.bf16.msra.mxu0 0
        %1205 = vmatprep.subr.bf16.mxu0 0
        %1206 = vmatpush1.bf16.msra.mxu0 0
        %1207 = vmatprep.subr.bf16.mxu0 0
        %1208 = vmatpush1.bf16.msra.mxu0 %v1191
        %1209 = vmatprep.subr.bf16.mxu0 0
        %1210 = vmatpush2.bf16.msra.mxu0 0
        %1211 = vmatprep.subr.bf16.mxu0 0
        %1212 = vmatpush2.bf16.msra.mxu0 0
        %1213 = vmatprep.subr.bf16.mxu0 0
        %1214 = vmatpush2.bf16.msra.mxu0 0
        %1215 = vmatprep.subr.bf16.mxu0 0
        %1216 = vmatpush2.bf16.msra.mxu0 0
        %1217 = vmatprep.subr.bf16.mxu0 0
        %1218 = vmatpush2.bf16.msra.mxu0 0
        %1219 = vmatprep.subr.bf16.mxu0 0
        %1220 = vmatpush2.bf16.msra.mxu0 0
        %1221 = vmatprep.subr.bf16.mxu0 0
        %1222 = vmatpush2.bf16.msra.mxu0 0
        %1223 = vmatprep.subr.bf16.mxu0 0
        %1224 = vmatpush2.bf16.msra.mxu0 0
        %1225 = vmatprep.mubr.bf16.mxu0 0
        %1226 = vmatmul.mubr.bf16.gmra.mxu0 %v1179
        %v1227 = vpop.f32.mrf.mxu0
        %v1228 = vadd.f32 0.0, %v1227
        %v1229 = vpop.f32.mrf.mxu0
        %v1230 = vpop.f32.mrf.mxu0
        %v1231 = vadd.f32 0.0, %v1230
        %v1232 = vpop.f32.mrf.mxu0
        %1233 = vmatprep.mubr.bf16.mxu0 0
        %1234 = vmatmul.mubr.bf16.gmra.mxu0 %v1182
        %v1235 = vpop.f32.mrf.mxu0
        %v1236 = vadd.f32 0.0, %v1235
        %v1237 = vpop.f32.mrf.mxu0
        %v1238 = vpop.f32.mrf.mxu0
        %v1239 = vadd.f32 0.0, %v1238
        %v1240 = vpop.f32.mrf.mxu0
        %1241 = vmatprep.mubr.bf16.mxu0 0
        %1242 = vmatmul.mubr.bf16.gmra.mxu0 %v1185
        %v1243 = vpop.f32.mrf.mxu0
        %v1244 = vadd.f32 0.0, %v1243
        %v1245 = vpop.f32.mrf.mxu0
        %v1246 = vpop.f32.mrf.mxu0
        %v1247 = vadd.f32 0.0, %v1246
        %v1248 = vpop.f32.mrf.mxu0
        %1249 = vmatprep.mubr.bf16.mxu0 0
        %1250 = vmatmul.mubr.bf16.gmra.mxu0 %v1188
        %v1251 = vpop.f32.mrf.mxu0
        %v1252 = vadd.f32 0.0, %v1251
        %v1253 = vpop.f32.mrf.mxu0
        %v1254 = vpop.f32.mrf.mxu0
        %v1255 = vadd.f32 0.0, %v1254
        %v1256 = vpop.f32.mrf.mxu0
        %1257 = vdwg.mxu0
        %v1258 = vadd.f32 %v1108, %v1228
        %v1259 = vadd.f32 %v1109, %v1231
        %v1260 = vadd.f32 %v1110, %v1236
        %v1261 = vadd.f32 %v1111, %v1239
        %v1262 = vadd.f32 %v1112, %v1244
        %v1263 = vadd.f32 %v1113, %v1247
        %v1264 = vadd.f32 %v1114, %v1252
        %v1265 = vadd.f32 %v1115, %v1255
        %v1266 = vunpack.c.l.bf16 %v213
        %v1267 = vpack.c.bf16 %v274, %v273
        %v1268 = vpack.c.bf16 %v276, %v275
        %v1269 = vpack.c.bf16 %v278, %v277
        %v1270 = vpack.c.bf16 %v1266, %v279
        %s1271 = scalar_lea.vmem %s1, 16
        %v1272 = vld [vmem:[%s1271] sm:$0x3]
        %v1274 = vsel %vm299, %v1267, 0
        %v1277 = vsel %vm299, %v1268, 0
        %v1280 = vsel %vm299, %v1269, 0
        %v1283 = vsel %vm299, %v1270, 0
        %v1286 = vsel %vm312, %v1272, 0
        %1288 = vmatprep.subr.bf16.mxu0 0
        %1289 = vmatpush1.bf16.msra.mxu0 0
        %1290 = vmatprep.subr.bf16.mxu0 0
        %1291 = vmatpush1.bf16.msra.mxu0 0
        %1292 = vmatprep.subr.bf16.mxu0 0
        %1293 = vmatpush1.bf16.msra.mxu0 0
        %1294 = vmatprep.subr.bf16.mxu0 0
        %1295 = vmatpush1.bf16.msra.mxu0 0
        %1296 = vmatprep.subr.bf16.mxu0 0
        %1297 = vmatpush1.bf16.msra.mxu0 0
        %1298 = vmatprep.subr.bf16.mxu0 0
        %1299 = vmatpush1.bf16.msra.mxu0 0
        %1300 = vmatprep.subr.bf16.mxu0 0
        %1301 = vmatpush1.bf16.msra.mxu0 0
        %1302 = vmatprep.subr.bf16.mxu0 0
        %1303 = vmatpush1.bf16.msra.mxu0 %v1286
        %1304 = vmatprep.subr.bf16.mxu0 0
        %1305 = vmatpush2.bf16.msra.mxu0 0
        %1306 = vmatprep.subr.bf16.mxu0 0
        %1307 = vmatpush2.bf16.msra.mxu0 0
        %1308 = vmatprep.subr.bf16.mxu0 0
        %1309 = vmatpush2.bf16.msra.mxu0 0
        %1310 = vmatprep.subr.bf16.mxu0 0
        %1311 = vmatpush2.bf16.msra.mxu0 0
        %1312 = vmatprep.subr.bf16.mxu0 0
        %1313 = vmatpush2.bf16.msra.mxu0 0
        %1314 = vmatprep.subr.bf16.mxu0 0
        %1315 = vmatpush2.bf16.msra.mxu0 0
        %1316 = vmatprep.subr.bf16.mxu0 0
        %1317 = vmatpush2.bf16.msra.mxu0 0
        %1318 = vmatprep.subr.bf16.mxu0 0
        %1319 = vmatpush2.bf16.msra.mxu0 0
        %1320 = vmatprep.mubr.bf16.mxu0 0
        %1321 = vmatmul.mubr.bf16.gmra.mxu0 %v1274
        %v1322 = vpop.f32.mrf.mxu0
        %v1323 = vadd.f32 0.0, %v1322
        %v1324 = vpop.f32.mrf.mxu0
        %v1325 = vpop.f32.mrf.mxu0
        %v1326 = vadd.f32 0.0, %v1325
        %v1327 = vpop.f32.mrf.mxu0
        %1328 = vmatprep.mubr.bf16.mxu0 0
        %1329 = vmatmul.mubr.bf16.gmra.mxu0 %v1277
        %v1330 = vpop.f32.mrf.mxu0
        %v1331 = vadd.f32 0.0, %v1330
        %v1332 = vpop.f32.mrf.mxu0
        %v1333 = vpop.f32.mrf.mxu0
        %v1334 = vadd.f32 0.0, %v1333
        %v1335 = vpop.f32.mrf.mxu0
        %1336 = vmatprep.mubr.bf16.mxu0 0
        %1337 = vmatmul.mubr.bf16.gmra.mxu0 %v1280
        %v1338 = vpop.f32.mrf.mxu0
        %v1339 = vadd.f32 0.0, %v1338
        %v1340 = vpop.f32.mrf.mxu0
        %v1341 = vpop.f32.mrf.mxu0
        %v1342 = vadd.f32 0.0, %v1341
        %v1343 = vpop.f32.mrf.mxu0
        %1344 = vmatprep.mubr.bf16.mxu0 0
        %1345 = vmatmul.mubr.bf16.gmra.mxu0 %v1283
        %v1346 = vpop.f32.mrf.mxu0
        %v1347 = vadd.f32 0.0, %v1346
        %v1348 = vpop.f32.mrf.mxu0
        %v1349 = vpop.f32.mrf.mxu0
        %v1350 = vadd.f32 0.0, %v1349
        %v1351 = vpop.f32.mrf.mxu0
        %1352 = vdwg.mxu0
        %v1353 = vadd.f32 %v1258, %v1323
        %v1354 = vadd.f32 %v1259, %v1326
        %v1355 = vadd.f32 %v1260, %v1331
        %v1356 = vadd.f32 %v1261, %v1334
        %v1357 = vadd.f32 %v1262, %v1339
        %v1358 = vadd.f32 %v1263, %v1342
        %v1359 = vadd.f32 %v1264, %v1347
        %v1360 = vadd.f32 %v1265, %v1350
        %v1361 = vunpack.c.l.bf16 %v232
        %v1362 = vpack.c.bf16 %v287, %v286
        %v1363 = vpack.c.bf16 %v289, %v288
        %v1364 = vpack.c.bf16 %v291, %v290
        %v1365 = vpack.c.bf16 %v1361, %v292
        %s1366 = scalar_lea.vmem %s1, 18
        %v1367 = vld [vmem:[%s1366] sm:$0x3]
        %v1369 = vsel %vm299, %v1362, 0
        %v1372 = vsel %vm299, %v1363, 0
        %v1375 = vsel %vm299, %v1364, 0
        %v1378 = vsel %vm299, %v1365, 0
        %v1381 = vsel %vm312, %v1367, 0
        %1383 = vmatprep.subr.bf16.mxu0 0
        %1384 = vmatpush1.bf16.msra.mxu0 0
        %1385 = vmatprep.subr.bf16.mxu0 0
        %1386 = vmatpush1.bf16.msra.mxu0 0
        %1387 = vmatprep.subr.bf16.mxu0 0
        %1388 = vmatpush1.bf16.msra.mxu0 0
        %1389 = vmatprep.subr.bf16.mxu0 0
        %1390 = vmatpush1.bf16.msra.mxu0 0
        %1391 = vmatprep.subr.bf16.mxu0 0
        %1392 = vmatpush1.bf16.msra.mxu0 0
        %1393 = vmatprep.subr.bf16.mxu0 0
        %1394 = vmatpush1.bf16.msra.mxu0 0
        %1395 = vmatprep.subr.bf16.mxu0 0
        %1396 = vmatpush1.bf16.msra.mxu0 0
        %1397 = vmatprep.subr.bf16.mxu0 0
        %1398 = vmatpush1.bf16.msra.mxu0 %v1381
        %1399 = vmatprep.subr.bf16.mxu0 0
        %1400 = vmatpush2.bf16.msra.mxu0 0
        %1401 = vmatprep.subr.bf16.mxu0 0
        %1402 = vmatpush2.bf16.msra.mxu0 0
        %1403 = vmatprep.subr.bf16.mxu0 0
        %1404 = vmatpush2.bf16.msra.mxu0 0
        %1405 = vmatprep.subr.bf16.mxu0 0
        %1406 = vmatpush2.bf16.msra.mxu0 0
        %1407 = vmatprep.subr.bf16.mxu0 0
        %1408 = vmatpush2.bf16.msra.mxu0 0
        %1409 = vmatprep.subr.bf16.mxu0 0
        %1410 = vmatpush2.bf16.msra.mxu0 0
        %1411 = vmatprep.subr.bf16.mxu0 0
        %1412 = vmatpush2.bf16.msra.mxu0 0
        %1413 = vmatprep.subr.bf16.mxu0 0
        %1414 = vmatpush2.bf16.msra.mxu0 0
        %1415 = vmatprep.mubr.bf16.mxu0 0
        %1416 = vmatmul.mubr.bf16.gmra.mxu0 %v1369
        %v1417 = vpop.f32.mrf.mxu0
        %v1418 = vadd.f32 0.0, %v1417
        %v1419 = vpop.f32.mrf.mxu0
        %v1420 = vpop.f32.mrf.mxu0
        %v1421 = vadd.f32 0.0, %v1420
        %v1422 = vpop.f32.mrf.mxu0
        %1423 = vmatprep.mubr.bf16.mxu0 0
        %1424 = vmatmul.mubr.bf16.gmra.mxu0 %v1372
        %v1425 = vpop.f32.mrf.mxu0
        %v1426 = vadd.f32 0.0, %v1425
        %v1427 = vpop.f32.mrf.mxu0
        %v1428 = vpop.f32.mrf.mxu0
        %v1429 = vadd.f32 0.0, %v1428
        %v1430 = vpop.f32.mrf.mxu0
        %1431 = vmatprep.mubr.bf16.mxu0 0
        %1432 = vmatmul.mubr.bf16.gmra.mxu0 %v1375
        %v1433 = vpop.f32.mrf.mxu0
        %v1434 = vadd.f32 0.0, %v1433
        %v1435 = vpop.f32.mrf.mxu0
        %v1436 = vpop.f32.mrf.mxu0
        %v1437 = vadd.f32 0.0, %v1436
        %v1438 = vpop.f32.mrf.mxu0
        %1439 = vmatprep.mubr.bf16.mxu0 0
        %1440 = vmatmul.mubr.bf16.gmra.mxu0 %v1378
        %v1441 = vpop.f32.mrf.mxu0
        %v1442 = vadd.f32 0.0, %v1441
        %v1443 = vpop.f32.mrf.mxu0
        %v1444 = vpop.f32.mrf.mxu0
        %v1445 = vadd.f32 0.0, %v1444
        %v1446 = vpop.f32.mrf.mxu0
        %1447 = vdwg.mxu0
        %v1448 = vadd.f32 %v1353, %v1418
        %v1449 = vadd.f32 %v1354, %v1421
        %v1450 = vadd.f32 %v1355, %v1426
        %v1451 = vadd.f32 %v1356, %v1429
        %v1452 = vadd.f32 %v1357, %v1434
        %v1453 = vadd.f32 %v1358, %v1437
        %v1454 = vadd.f32 %v1359, %v1442
        %v1455 = vadd.f32 %v1360, %v1445
        %v1456 = vunpack.c.l.bf16 %v214
        %v1459 = vrot.slane %v1266, 1
        %v1460 = vrot.slane %v1456, 1
        %v1461 = vsel %vm485, %v1459, %v1460
        %v1463 = vpack.c.bf16 %v494, %v491
        %v1464 = vpack.c.bf16 %v500, %v497
        %v1465 = vpack.c.bf16 %v506, %v503
        %v1466 = vpack.c.bf16 %v1461, %v509
        %s1467 = scalar_lea.vmem %s1, 20
        %v1468 = vld [vmem:[%s1467] sm:$0x3]
        %v1470 = vsel %vm299, %v1463, 0
        %v1473 = vsel %vm299, %v1464, 0
        %v1476 = vsel %vm299, %v1465, 0
        %v1479 = vsel %vm299, %v1466, 0
        %v1482 = vsel %vm312, %v1468, 0
        %1484 = vmatprep.subr.bf16.mxu0 0
        %1485 = vmatpush1.bf16.msra.mxu0 0
        %1486 = vmatprep.subr.bf16.mxu0 0
        %1487 = vmatpush1.bf16.msra.mxu0 0
        %1488 = vmatprep.subr.bf16.mxu0 0
        %1489 = vmatpush1.bf16.msra.mxu0 0
        %1490 = vmatprep.subr.bf16.mxu0 0
        %1491 = vmatpush1.bf16.msra.mxu0 0
        %1492 = vmatprep.subr.bf16.mxu0 0
        %1493 = vmatpush1.bf16.msra.mxu0 0
        %1494 = vmatprep.subr.bf16.mxu0 0
        %1495 = vmatpush1.bf16.msra.mxu0 0
        %1496 = vmatprep.subr.bf16.mxu0 0
        %1497 = vmatpush1.bf16.msra.mxu0 0
        %1498 = vmatprep.subr.bf16.mxu0 0
        %1499 = vmatpush1.bf16.msra.mxu0 %v1482
        %1500 = vmatprep.subr.bf16.mxu0 0
        %1501 = vmatpush2.bf16.msra.mxu0 0
        %1502 = vmatprep.subr.bf16.mxu0 0
        %1503 = vmatpush2.bf16.msra.mxu0 0
        %1504 = vmatprep.subr.bf16.mxu0 0
        %1505 = vmatpush2.bf16.msra.mxu0 0
        %1506 = vmatprep.subr.bf16.mxu0 0
        %1507 = vmatpush2.bf16.msra.mxu0 0
        %1508 = vmatprep.subr.bf16.mxu0 0
        %1509 = vmatpush2.bf16.msra.mxu0 0
        %1510 = vmatprep.subr.bf16.mxu0 0
        %1511 = vmatpush2.bf16.msra.mxu0 0
        %1512 = vmatprep.subr.bf16.mxu0 0
        %1513 = vmatpush2.bf16.msra.mxu0 0
        %1514 = vmatprep.subr.bf16.mxu0 0
        %1515 = vmatpush2.bf16.msra.mxu0 0
        %1516 = vmatprep.mubr.bf16.mxu0 0
        %1517 = vmatmul.mubr.bf16.gmra.mxu0 %v1470
        %v1518 = vpop.f32.mrf.mxu0
        %v1519 = vadd.f32 0.0, %v1518
        %v1520 = vpop.f32.mrf.mxu0
        %v1521 = vpop.f32.mrf.mxu0
        %v1522 = vadd.f32 0.0, %v1521
        %v1523 = vpop.f32.mrf.mxu0
        %1524 = vmatprep.mubr.bf16.mxu0 0
        %1525 = vmatmul.mubr.bf16.gmra.mxu0 %v1473
        %v1526 = vpop.f32.mrf.mxu0
        %v1527 = vadd.f32 0.0, %v1526
        %v1528 = vpop.f32.mrf.mxu0
        %v1529 = vpop.f32.mrf.mxu0
        %v1530 = vadd.f32 0.0, %v1529
        %v1531 = vpop.f32.mrf.mxu0
        %1532 = vmatprep.mubr.bf16.mxu0 0
        %1533 = vmatmul.mubr.bf16.gmra.mxu0 %v1476
        %v1534 = vpop.f32.mrf.mxu0
        %v1535 = vadd.f32 0.0, %v1534
        %v1536 = vpop.f32.mrf.mxu0
        %v1537 = vpop.f32.mrf.mxu0
        %v1538 = vadd.f32 0.0, %v1537
        %v1539 = vpop.f32.mrf.mxu0
        %1540 = vmatprep.mubr.bf16.mxu0 0
        %1541 = vmatmul.mubr.bf16.gmra.mxu0 %v1479
        %v1542 = vpop.f32.mrf.mxu0
        %v1543 = vadd.f32 0.0, %v1542
        %v1544 = vpop.f32.mrf.mxu0
        %v1545 = vpop.f32.mrf.mxu0
        %v1546 = vadd.f32 0.0, %v1545
        %v1547 = vpop.f32.mrf.mxu0
        %1548 = vdwg.mxu0
        %v1549 = vadd.f32 %v1448, %v1519
        %v1550 = vadd.f32 %v1449, %v1522
        %v1551 = vadd.f32 %v1450, %v1527
        %v1552 = vadd.f32 %v1451, %v1530
        %v1553 = vadd.f32 %v1452, %v1535
        %v1554 = vadd.f32 %v1453, %v1538
        %v1555 = vadd.f32 %v1454, %v1543
        %v1556 = vadd.f32 %v1455, %v1546
        %v1557 = vunpack.c.l.bf16 %v233
        %v1560 = vrot.slane %v1361, 1
        %v1561 = vrot.slane %v1557, 1
        %v1562 = vsel %vm485, %v1560, %v1561
        %v1564 = vpack.c.bf16 %v644, %v641
        %v1565 = vpack.c.bf16 %v650, %v647
        %v1566 = vpack.c.bf16 %v656, %v653
        %v1567 = vpack.c.bf16 %v1562, %v659
        %s1568 = scalar_lea.vmem %s1, 22
        %v1569 = vld [vmem:[%s1568] sm:$0x3]
        %v1571 = vsel %vm299, %v1564, 0
        %v1574 = vsel %vm299, %v1565, 0
        %v1577 = vsel %vm299, %v1566, 0
        %v1580 = vsel %vm299, %v1567, 0
        %v1583 = vsel %vm312, %v1569, 0
        %1585 = vmatprep.subr.bf16.mxu0 0
        %1586 = vmatpush1.bf16.msra.mxu0 0
        %1587 = vmatprep.subr.bf16.mxu0 0
        %1588 = vmatpush1.bf16.msra.mxu0 0
        %1589 = vmatprep.subr.bf16.mxu0 0
        %1590 = vmatpush1.bf16.msra.mxu0 0
        %1591 = vmatprep.subr.bf16.mxu0 0
        %1592 = vmatpush1.bf16.msra.mxu0 0
        %1593 = vmatprep.subr.bf16.mxu0 0
        %1594 = vmatpush1.bf16.msra.mxu0 0
        %1595 = vmatprep.subr.bf16.mxu0 0
        %1596 = vmatpush1.bf16.msra.mxu0 0
        %1597 = vmatprep.subr.bf16.mxu0 0
        %1598 = vmatpush1.bf16.msra.mxu0 0
        %1599 = vmatprep.subr.bf16.mxu0 0
        %1600 = vmatpush1.bf16.msra.mxu0 %v1583
        %1601 = vmatprep.subr.bf16.mxu0 0
        %1602 = vmatpush2.bf16.msra.mxu0 0
        %1603 = vmatprep.subr.bf16.mxu0 0
        %1604 = vmatpush2.bf16.msra.mxu0 0
        %1605 = vmatprep.subr.bf16.mxu0 0
        %1606 = vmatpush2.bf16.msra.mxu0 0
        %1607 = vmatprep.subr.bf16.mxu0 0
        %1608 = vmatpush2.bf16.msra.mxu0 0
        %1609 = vmatprep.subr.bf16.mxu0 0
        %1610 = vmatpush2.bf16.msra.mxu0 0
        %1611 = vmatprep.subr.bf16.mxu0 0
        %1612 = vmatpush2.bf16.msra.mxu0 0
        %1613 = vmatprep.subr.bf16.mxu0 0
        %1614 = vmatpush2.bf16.msra.mxu0 0
        %1615 = vmatprep.subr.bf16.mxu0 0
        %1616 = vmatpush2.bf16.msra.mxu0 0
        %1617 = vmatprep.mubr.bf16.mxu0 0
        %1618 = vmatmul.mubr.bf16.gmra.mxu0 %v1571
        %v1619 = vpop.f32.mrf.mxu0
        %v1620 = vadd.f32 0.0, %v1619
        %v1621 = vpop.f32.mrf.mxu0
        %v1622 = vpop.f32.mrf.mxu0
        %v1623 = vadd.f32 0.0, %v1622
        %v1624 = vpop.f32.mrf.mxu0
        %1625 = vmatprep.mubr.bf16.mxu0 0
        %1626 = vmatmul.mubr.bf16.gmra.mxu0 %v1574
        %v1627 = vpop.f32.mrf.mxu0
        %v1628 = vadd.f32 0.0, %v1627
        %v1629 = vpop.f32.mrf.mxu0
        %v1630 = vpop.f32.mrf.mxu0
        %v1631 = vadd.f32 0.0, %v1630
        %v1632 = vpop.f32.mrf.mxu0
        %1633 = vmatprep.mubr.bf16.mxu0 0
        %1634 = vmatmul.mubr.bf16.gmra.mxu0 %v1577
        %v1635 = vpop.f32.mrf.mxu0
        %v1636 = vadd.f32 0.0, %v1635
        %v1637 = vpop.f32.mrf.mxu0
        %v1638 = vpop.f32.mrf.mxu0
        %v1639 = vadd.f32 0.0, %v1638
        %v1640 = vpop.f32.mrf.mxu0
        %1641 = vmatprep.mubr.bf16.mxu0 0
        %1642 = vmatmul.mubr.bf16.gmra.mxu0 %v1580
        %v1643 = vpop.f32.mrf.mxu0
        %v1644 = vadd.f32 0.0, %v1643
        %v1645 = vpop.f32.mrf.mxu0
        %v1646 = vpop.f32.mrf.mxu0
        %v1647 = vadd.f32 0.0, %v1646
        %v1648 = vpop.f32.mrf.mxu0
        %1649 = vdwg.mxu0
        %v1650 = vadd.f32 %v1549, %v1620
        %v1651 = vadd.f32 %v1550, %v1623
        %v1652 = vadd.f32 %v1551, %v1628
        %v1653 = vadd.f32 %v1552, %v1631
        %v1654 = vadd.f32 %v1553, %v1636
        %v1655 = vadd.f32 %v1554, %v1639
        %v1656 = vadd.f32 %v1555, %v1644
        %v1657 = vadd.f32 %v1556, %v1647
        %v1658 = vunpack.c.l.bf16 %v251
        %v1659 = vpack.c.bf16 %v764, %v763
        %v1660 = vpack.c.bf16 %v766, %v765
        %v1661 = vpack.c.bf16 %v768, %v767
        %v1662 = vpack.c.bf16 %v1658, %v769
        %s1663 = scalar_lea.vmem %s1, 24
        %v1664 = vld [vmem:[%s1663] sm:$0x3]
        %v1666 = vsel %vm299, %v1659, 0
        %v1669 = vsel %vm299, %v1660, 0
        %v1672 = vsel %vm299, %v1661, 0
        %v1675 = vsel %vm299, %v1662, 0
        %v1678 = vsel %vm312, %v1664, 0
        %1680 = vmatprep.subr.bf16.mxu0 0
        %1681 = vmatpush1.bf16.msra.mxu0 0
        %1682 = vmatprep.subr.bf16.mxu0 0
        %1683 = vmatpush1.bf16.msra.mxu0 0
        %1684 = vmatprep.subr.bf16.mxu0 0
        %1685 = vmatpush1.bf16.msra.mxu0 0
        %1686 = vmatprep.subr.bf16.mxu0 0
        %1687 = vmatpush1.bf16.msra.mxu0 0
        %1688 = vmatprep.subr.bf16.mxu0 0
        %1689 = vmatpush1.bf16.msra.mxu0 0
        %1690 = vmatprep.subr.bf16.mxu0 0
        %1691 = vmatpush1.bf16.msra.mxu0 0
        %1692 = vmatprep.subr.bf16.mxu0 0
        %1693 = vmatpush1.bf16.msra.mxu0 0
        %1694 = vmatprep.subr.bf16.mxu0 0
        %1695 = vmatpush1.bf16.msra.mxu0 %v1678
        %1696 = vmatprep.subr.bf16.mxu0 0
        %1697 = vmatpush2.bf16.msra.mxu0 0
        %1698 = vmatprep.subr.bf16.mxu0 0
        %1699 = vmatpush2.bf16.msra.mxu0 0
        %1700 = vmatprep.subr.bf16.mxu0 0
        %1701 = vmatpush2.bf16.msra.mxu0 0
        %1702 = vmatprep.subr.bf16.mxu0 0
        %1703 = vmatpush2.bf16.msra.mxu0 0
        %1704 = vmatprep.subr.bf16.mxu0 0
        %1705 = vmatpush2.bf16.msra.mxu0 0
        %1706 = vmatprep.subr.bf16.mxu0 0
        %1707 = vmatpush2.bf16.msra.mxu0 0
        %1708 = vmatprep.subr.bf16.mxu0 0
        %1709 = vmatpush2.bf16.msra.mxu0 0
        %1710 = vmatprep.subr.bf16.mxu0 0
        %1711 = vmatpush2.bf16.msra.mxu0 0
        %1712 = vmatprep.mubr.bf16.mxu0 0
        %1713 = vmatmul.mubr.bf16.gmra.mxu0 %v1666
        %v1714 = vpop.f32.mrf.mxu0
        %v1715 = vadd.f32 0.0, %v1714
        %v1716 = vpop.f32.mrf.mxu0
        %v1717 = vpop.f32.mrf.mxu0
        %v1718 = vadd.f32 0.0, %v1717
        %v1719 = vpop.f32.mrf.mxu0
        %1720 = vmatprep.mubr.bf16.mxu0 0
        %1721 = vmatmul.mubr.bf16.gmra.mxu0 %v1669
        %v1722 = vpop.f32.mrf.mxu0
        %v1723 = vadd.f32 0.0, %v1722
        %v1724 = vpop.f32.mrf.mxu0
        %v1725 = vpop.f32.mrf.mxu0
        %v1726 = vadd.f32 0.0, %v1725
        %v1727 = vpop.f32.mrf.mxu0
        %1728 = vmatprep.mubr.bf16.mxu0 0
        %1729 = vmatmul.mubr.bf16.gmra.mxu0 %v1672
        %v1730 = vpop.f32.mrf.mxu0
        %v1731 = vadd.f32 0.0, %v1730
        %v1732 = vpop.f32.mrf.mxu0
        %v1733 = vpop.f32.mrf.mxu0
        %v1734 = vadd.f32 0.0, %v1733
        %v1735 = vpop.f32.mrf.mxu0
        %1736 = vmatprep.mubr.bf16.mxu0 0
        %1737 = vmatmul.mubr.bf16.gmra.mxu0 %v1675
        %v1738 = vpop.f32.mrf.mxu0
        %v1739 = vadd.f32 0.0, %v1738
        %v1740 = vpop.f32.mrf.mxu0
        %v1741 = vpop.f32.mrf.mxu0
        %v1742 = vadd.f32 0.0, %v1741
        %v1743 = vpop.f32.mrf.mxu0
        %1744 = vdwg.mxu0
        %v1745 = vadd.f32 %v1650, %v1715
        %v1746 = vadd.f32 %v1651, %v1718
        %v1747 = vadd.f32 %v1652, %v1723
        %v1748 = vadd.f32 %v1653, %v1726
        %v1749 = vadd.f32 %v1654, %v1731
        %v1750 = vadd.f32 %v1655, %v1734
        %v1751 = vadd.f32 %v1656, %v1739
        %v1752 = vadd.f32 %v1657, %v1742
        %v1753 = vunpack.c.l.bf16 %v270
        %v1754 = vpack.c.bf16 %v866, %v865
        %v1755 = vpack.c.bf16 %v868, %v867
        %v1756 = vpack.c.bf16 %v870, %v869
        %v1757 = vpack.c.bf16 %v1753, %v871
        %s1758 = scalar_lea.vmem %s1, 26
        %v1759 = vld [vmem:[%s1758] sm:$0x3]
        %v1761 = vsel %vm299, %v1754, 0
        %v1764 = vsel %vm299, %v1755, 0
        %v1767 = vsel %vm299, %v1756, 0
        %v1770 = vsel %vm299, %v1757, 0
        %v1773 = vsel %vm312, %v1759, 0
        %1775 = vmatprep.subr.bf16.mxu0 0
        %1776 = vmatpush1.bf16.msra.mxu0 0
        %1777 = vmatprep.subr.bf16.mxu0 0
        %1778 = vmatpush1.bf16.msra.mxu0 0
        %1779 = vmatprep.subr.bf16.mxu0 0
        %1780 = vmatpush1.bf16.msra.mxu0 0
        %1781 = vmatprep.subr.bf16.mxu0 0
        %1782 = vmatpush1.bf16.msra.mxu0 0
        %1783 = vmatprep.subr.bf16.mxu0 0
        %1784 = vmatpush1.bf16.msra.mxu0 0
        %1785 = vmatprep.subr.bf16.mxu0 0
        %1786 = vmatpush1.bf16.msra.mxu0 0
        %1787 = vmatprep.subr.bf16.mxu0 0
        %1788 = vmatpush1.bf16.msra.mxu0 0
        %1789 = vmatprep.subr.bf16.mxu0 0
        %1790 = vmatpush1.bf16.msra.mxu0 %v1773
        %1791 = vmatprep.subr.bf16.mxu0 0
        %1792 = vmatpush2.bf16.msra.mxu0 0
        %1793 = vmatprep.subr.bf16.mxu0 0
        %1794 = vmatpush2.bf16.msra.mxu0 0
        %1795 = vmatprep.subr.bf16.mxu0 0
        %1796 = vmatpush2.bf16.msra.mxu0 0
        %1797 = vmatprep.subr.bf16.mxu0 0
        %1798 = vmatpush2.bf16.msra.mxu0 0
        %1799 = vmatprep.subr.bf16.mxu0 0
        %1800 = vmatpush2.bf16.msra.mxu0 0
        %1801 = vmatprep.subr.bf16.mxu0 0
        %1802 = vmatpush2.bf16.msra.mxu0 0
        %1803 = vmatprep.subr.bf16.mxu0 0
        %1804 = vmatpush2.bf16.msra.mxu0 0
        %1805 = vmatprep.subr.bf16.mxu0 0
        %1806 = vmatpush2.bf16.msra.mxu0 0
        %1807 = vmatprep.mubr.bf16.mxu0 0
        %1808 = vmatmul.mubr.bf16.gmra.mxu0 %v1761
        %v1809 = vpop.f32.mrf.mxu0
        %v1810 = vadd.f32 0.0, %v1809
        %v1811 = vpop.f32.mrf.mxu0
        %v1812 = vpop.f32.mrf.mxu0
        %v1813 = vadd.f32 0.0, %v1812
        %v1814 = vpop.f32.mrf.mxu0
        %1815 = vmatprep.mubr.bf16.mxu0 0
        %1816 = vmatmul.mubr.bf16.gmra.mxu0 %v1764
        %v1817 = vpop.f32.mrf.mxu0
        %v1818 = vadd.f32 0.0, %v1817
        %v1819 = vpop.f32.mrf.mxu0
        %v1820 = vpop.f32.mrf.mxu0
        %v1821 = vadd.f32 0.0, %v1820
        %v1822 = vpop.f32.mrf.mxu0
        %1823 = vmatprep.mubr.bf16.mxu0 0
        %1824 = vmatmul.mubr.bf16.gmra.mxu0 %v1767
        %v1825 = vpop.f32.mrf.mxu0
        %v1826 = vadd.f32 0.0, %v1825
        %v1827 = vpop.f32.mrf.mxu0
        %v1828 = vpop.f32.mrf.mxu0
        %v1829 = vadd.f32 0.0, %v1828
        %v1830 = vpop.f32.mrf.mxu0
        %1831 = vmatprep.mubr.bf16.mxu0 0
        %1832 = vmatmul.mubr.bf16.gmra.mxu0 %v1770
        %v1833 = vpop.f32.mrf.mxu0
        %v1834 = vadd.f32 0.0, %v1833
        %v1835 = vpop.f32.mrf.mxu0
        %v1836 = vpop.f32.mrf.mxu0
        %v1837 = vadd.f32 0.0, %v1836
        %v1838 = vpop.f32.mrf.mxu0
        %1839 = vdwg.mxu0
        %v1840 = vadd.f32 %v1745, %v1810
        %v1841 = vadd.f32 %v1746, %v1813
        %v1842 = vadd.f32 %v1747, %v1818
        %v1843 = vadd.f32 %v1748, %v1821
        %v1844 = vadd.f32 %v1749, %v1826
        %v1845 = vadd.f32 %v1750, %v1829
        %v1846 = vadd.f32 %v1751, %v1834
        %v1847 = vadd.f32 %v1752, %v1837
        %v1848 = vunpack.c.l.bf16 %v252
        %v1851 = vrot.slane %v1658, 1
        %v1852 = vrot.slane %v1848, 1
        %v1853 = vsel %vm485, %v1851, %v1852
        %v1855 = vpack.c.bf16 %v998, %v995
        %v1856 = vpack.c.bf16 %v1004, %v1001
        %v1857 = vpack.c.bf16 %v1010, %v1007
        %v1858 = vpack.c.bf16 %v1853, %v1013
        %s1859 = scalar_lea.vmem %s1, 28
        %v1860 = vld [vmem:[%s1859] sm:$0x3]
        %v1862 = vsel %vm299, %v1855, 0
        %v1865 = vsel %vm299, %v1856, 0
        %v1868 = vsel %vm299, %v1857, 0
        %v1871 = vsel %vm299, %v1858, 0
        %v1874 = vsel %vm312, %v1860, 0
        %1876 = vmatprep.subr.bf16.mxu0 0
        %1877 = vmatpush1.bf16.msra.mxu0 0
        %1878 = vmatprep.subr.bf16.mxu0 0
        %1879 = vmatpush1.bf16.msra.mxu0 0
        %1880 = vmatprep.subr.bf16.mxu0 0
        %1881 = vmatpush1.bf16.msra.mxu0 0
        %1882 = vmatprep.subr.bf16.mxu0 0
        %1883 = vmatpush1.bf16.msra.mxu0 0
        %1884 = vmatprep.subr.bf16.mxu0 0
        %1885 = vmatpush1.bf16.msra.mxu0 0
        %1886 = vmatprep.subr.bf16.mxu0 0
        %1887 = vmatpush1.bf16.msra.mxu0 0
        %1888 = vmatprep.subr.bf16.mxu0 0
        %1889 = vmatpush1.bf16.msra.mxu0 0
        %1890 = vmatprep.subr.bf16.mxu0 0
        %1891 = vmatpush1.bf16.msra.mxu0 %v1874
        %1892 = vmatprep.subr.bf16.mxu0 0
        %1893 = vmatpush2.bf16.msra.mxu0 0
        %1894 = vmatprep.subr.bf16.mxu0 0
        %1895 = vmatpush2.bf16.msra.mxu0 0
        %1896 = vmatprep.subr.bf16.mxu0 0
        %1897 = vmatpush2.bf16.msra.mxu0 0
        %1898 = vmatprep.subr.bf16.mxu0 0
        %1899 = vmatpush2.bf16.msra.mxu0 0
        %1900 = vmatprep.subr.bf16.mxu0 0
        %1901 = vmatpush2.bf16.msra.mxu0 0
        %1902 = vmatprep.subr.bf16.mxu0 0
        %1903 = vmatpush2.bf16.msra.mxu0 0
        %1904 = vmatprep.subr.bf16.mxu0 0
        %1905 = vmatpush2.bf16.msra.mxu0 0
        %1906 = vmatprep.subr.bf16.mxu0 0
        %1907 = vmatpush2.bf16.msra.mxu0 0
        %1908 = vmatprep.mubr.bf16.mxu0 0
        %1909 = vmatmul.mubr.bf16.gmra.mxu0 %v1862
        %v1910 = vpop.f32.mrf.mxu0
        %v1911 = vadd.f32 0.0, %v1910
        %v1912 = vpop.f32.mrf.mxu0
        %v1913 = vpop.f32.mrf.mxu0
        %v1914 = vadd.f32 0.0, %v1913
        %v1915 = vpop.f32.mrf.mxu0
        %1916 = vmatprep.mubr.bf16.mxu0 0
        %1917 = vmatmul.mubr.bf16.gmra.mxu0 %v1865
        %v1918 = vpop.f32.mrf.mxu0
        %v1919 = vadd.f32 0.0, %v1918
        %v1920 = vpop.f32.mrf.mxu0
        %v1921 = vpop.f32.mrf.mxu0
        %v1922 = vadd.f32 0.0, %v1921
        %v1923 = vpop.f32.mrf.mxu0
        %1924 = vmatprep.mubr.bf16.mxu0 0
        %1925 = vmatmul.mubr.bf16.gmra.mxu0 %v1868
        %v1926 = vpop.f32.mrf.mxu0
        %v1927 = vadd.f32 0.0, %v1926
        %v1928 = vpop.f32.mrf.mxu0
        %v1929 = vpop.f32.mrf.mxu0
        %v1930 = vadd.f32 0.0, %v1929
        %v1931 = vpop.f32.mrf.mxu0
        %1932 = vmatprep.mubr.bf16.mxu0 0
        %1933 = vmatmul.mubr.bf16.gmra.mxu0 %v1871
        %v1934 = vpop.f32.mrf.mxu0
        %v1935 = vadd.f32 0.0, %v1934
        %v1936 = vpop.f32.mrf.mxu0
        %v1937 = vpop.f32.mrf.mxu0
        %v1938 = vadd.f32 0.0, %v1937
        %v1939 = vpop.f32.mrf.mxu0
        %1940 = vdwg.mxu0
        %v1941 = vadd.f32 %v1840, %v1911
        %v1942 = vadd.f32 %v1841, %v1914
        %v1943 = vadd.f32 %v1842, %v1919
        %v1944 = vadd.f32 %v1843, %v1922
        %v1945 = vadd.f32 %v1844, %v1927
        %v1946 = vadd.f32 %v1845, %v1930
        %v1947 = vadd.f32 %v1846, %v1935
        %v1948 = vadd.f32 %v1847, %v1938
        %v1949 = vunpack.c.l.bf16 %v271
        %v1952 = vrot.slane %v1753, 1
        %v1953 = vrot.slane %v1949, 1
        %v1954 = vsel %vm485, %v1952, %v1953
        %v1956 = vpack.c.bf16 %v1148, %v1145
        %v1957 = vpack.c.bf16 %v1154, %v1151
        %v1958 = vpack.c.bf16 %v1160, %v1157
        %v1959 = vpack.c.bf16 %v1954, %v1163
        %s1960 = scalar_lea.vmem %s1, 30
        %v1961 = vld [vmem:[%s1960] sm:$0x3]
        %v1963 = vsel %vm299, %v1956, 0
        %v1966 = vsel %vm299, %v1957, 0
        %v1969 = vsel %vm299, %v1958, 0
        %v1972 = vsel %vm299, %v1959, 0
        %v1975 = vsel %vm312, %v1961, 0
        %1977 = vmatprep.subr.bf16.mxu0 0
        %1978 = vmatpush1.bf16.msra.mxu0 0
        %1979 = vmatprep.subr.bf16.mxu0 0
        %1980 = vmatpush1.bf16.msra.mxu0 0
        %1981 = vmatprep.subr.bf16.mxu0 0
        %1982 = vmatpush1.bf16.msra.mxu0 0
        %1983 = vmatprep.subr.bf16.mxu0 0
        %1984 = vmatpush1.bf16.msra.mxu0 0
        %1985 = vmatprep.subr.bf16.mxu0 0
        %1986 = vmatpush1.bf16.msra.mxu0 0
        %1987 = vmatprep.subr.bf16.mxu0 0
        %1988 = vmatpush1.bf16.msra.mxu0 0
        %1989 = vmatprep.subr.bf16.mxu0 0
        %1990 = vmatpush1.bf16.msra.mxu0 0
        %1991 = vmatprep.subr.bf16.mxu0 0
        %1992 = vmatpush1.bf16.msra.mxu0 %v1975
        %1993 = vmatprep.subr.bf16.mxu0 0
        %1994 = vmatpush2.bf16.msra.mxu0 0
        %1995 = vmatprep.subr.bf16.mxu0 0
        %1996 = vmatpush2.bf16.msra.mxu0 0
        %1997 = vmatprep.subr.bf16.mxu0 0
        %1998 = vmatpush2.bf16.msra.mxu0 0
        %1999 = vmatprep.subr.bf16.mxu0 0
        %2000 = vmatpush2.bf16.msra.mxu0 0
        %2001 = vmatprep.subr.bf16.mxu0 0
        %2002 = vmatpush2.bf16.msra.mxu0 0
        %2003 = vmatprep.subr.bf16.mxu0 0
        %2004 = vmatpush2.bf16.msra.mxu0 0
        %2005 = vmatprep.subr.bf16.mxu0 0
        %2006 = vmatpush2.bf16.msra.mxu0 0
        %2007 = vmatprep.subr.bf16.mxu0 0
        %2008 = vmatpush2.bf16.msra.mxu0 0
        %2009 = vmatprep.mubr.bf16.mxu0 0
        %2010 = vmatmul.mubr.bf16.gmra.mxu0 %v1963
        %v2011 = vpop.f32.mrf.mxu0
        %v2012 = vadd.f32 0.0, %v2011
        %v2013 = vpop.f32.mrf.mxu0
        %v2014 = vpop.f32.mrf.mxu0
        %v2015 = vadd.f32 0.0, %v2014
        %v2016 = vpop.f32.mrf.mxu0
        %2017 = vmatprep.mubr.bf16.mxu0 0
        %2018 = vmatmul.mubr.bf16.gmra.mxu0 %v1966
        %v2019 = vpop.f32.mrf.mxu0
        %v2020 = vadd.f32 0.0, %v2019
        %v2021 = vpop.f32.mrf.mxu0
        %v2022 = vpop.f32.mrf.mxu0
        %v2023 = vadd.f32 0.0, %v2022
        %v2024 = vpop.f32.mrf.mxu0
        %2025 = vmatprep.mubr.bf16.mxu0 0
        %2026 = vmatmul.mubr.bf16.gmra.mxu0 %v1969
        %v2027 = vpop.f32.mrf.mxu0
        %v2028 = vadd.f32 0.0, %v2027
        %v2029 = vpop.f32.mrf.mxu0
        %v2030 = vpop.f32.mrf.mxu0
        %v2031 = vadd.f32 0.0, %v2030
        %v2032 = vpop.f32.mrf.mxu0
        %2033 = vmatprep.mubr.bf16.mxu0 0
        %2034 = vmatmul.mubr.bf16.gmra.mxu0 %v1972
        %v2035 = vpop.f32.mrf.mxu0
        %v2036 = vadd.f32 0.0, %v2035
        %v2037 = vpop.f32.mrf.mxu0
        %v2038 = vpop.f32.mrf.mxu0
        %v2039 = vadd.f32 0.0, %v2038
        %v2040 = vpop.f32.mrf.mxu0
        %2041 = vdwg.mxu0
        %v2042 = vadd.f32 %v1941, %v2012
        %v2043 = vadd.f32 %v1942, %v2015
        %v2044 = vadd.f32 %v1943, %v2020
        %v2045 = vadd.f32 %v1944, %v2023
        %v2046 = vadd.f32 %v1945, %v2028
        %v2047 = vadd.f32 %v1946, %v2031
        %v2048 = vadd.f32 %v1947, %v2036
        %v2049 = vadd.f32 %v1948, %v2039
        %v2050 = vadd.f32 %v2042, %v2043
        %v2051 = vadd.f32 %v2050, %v2044
        %v2052 = vadd.f32 %v2051, %v2045
        %v2053 = vadd.f32 %v2052, %v2046
        %v2054 = vadd.f32 %v2053, %v2047
        %v2055 = vadd.f32 %v2054, %v2048
        %v2056 = vadd.f32 %v2055, %v2049
        %v2057 = vrot.slane %v2056, 4
        %v2058 = vadd.f32 %v2056, %v2057
        %v2059 = vrot.slane %v2058, 2
        %v2060 = vadd.f32 %v2058, %v2059
        %v2061 = vrot.slane %v2060, 1
        %v2062 = vadd.f32 %v2060, %v2061
        %v2063 = vmul.f32 %v2062, 0.015625
        %v2064 = vmul.f32 %v2042, %v2042
        %v2065 = vmul.f32 %v2043, %v2043
        %v2066 = vmul.f32 %v2044, %v2044
        %v2067 = vmul.f32 %v2045, %v2045
        %v2068 = vmul.f32 %v2046, %v2046
        %v2069 = vmul.f32 %v2047, %v2047
        %v2070 = vmul.f32 %v2048, %v2048
        %v2071 = vmul.f32 %v2049, %v2049
        %v2072 = vadd.f32 %v2064, %v2065
        %v2073 = vadd.f32 %v2072, %v2066
        %v2074 = vadd.f32 %v2073, %v2067
        %v2075 = vadd.f32 %v2074, %v2068
        %v2076 = vadd.f32 %v2075, %v2069
        %v2077 = vadd.f32 %v2076, %v2070
        %v2078 = vadd.f32 %v2077, %v2071
        %v2079 = vrot.slane %v2078, 4
        %v2080 = vadd.f32 %v2078, %v2079
        %v2081 = vrot.slane %v2080, 2
        %v2082 = vadd.f32 %v2080, %v2081
        %v2083 = vrot.slane %v2082, 1
        %v2084 = vadd.f32 %v2082, %v2083
        %v2085 = vmul.f32 %v2084, 0.015625
        %v2086 = vmul.f32 %v2063, %v2063
        %v2087 = vsub.f32 %v2085, %v2086
        %v2088 = vmax.f32 %v2087, 0.0
        %v2089 = vadd.f32 %v2088, 1e-05
        %v2090 = vrsqrt.pop %v2089
        %v2091 = vld [vmem:[%s2] sm:$0x1]
        %v2092 = vmul.f32 %v2091, %v2090
        %v2093 = vld [vmem:[%s3] sm:$0x1]
        %v2094 = vmul.f32 %v2063, %v2092
        %v2095 = vsub.f32 %v2093, %v2094
        %v2097 = vlaneseq
        %v2098 = vshrl.u32 %v2097, 7
        %v2099 = vsub.s32 0, %v2098
        %v2100 = vrot.slane %v2092, %v2099
        %v2102 = vmul.f32 %v2042, %v2100
        %v2103 = vmul.f32 %v2043, %v2100
        %v2104 = vmul.f32 %v2044, %v2100
        %v2105 = vmul.f32 %v2045, %v2100
        %v2106 = vmul.f32 %v2046, %v2100
        %v2107 = vmul.f32 %v2047, %v2100
        %v2108 = vmul.f32 %v2048, %v2100
        %v2109 = vmul.f32 %v2049, %v2100
        %v2111 = vlaneseq
        %v2112 = vshrl.u32 %v2111, 7
        %v2113 = vsub.s32 0, %v2112
        %v2114 = vrot.slane %v2095, %v2113
        %v2116 = vadd.f32 %v2102, %v2114
        %v2117 = vadd.f32 %v2103, %v2114
        %v2118 = vadd.f32 %v2104, %v2114
        %v2119 = vadd.f32 %v2105, %v2114
        %v2120 = vadd.f32 %v2106, %v2114
        %v2121 = vadd.f32 %v2107, %v2114
        %v2122 = vadd.f32 %v2108, %v2114
        %v2123 = vadd.f32 %v2109, %v2114
        %v2124 = vmax.f32 %v2116, 0.0
        %v2125 = vmax.f32 %v2117, 0.0
        %v2126 = vmax.f32 %v2118, 0.0
        %v2127 = vmax.f32 %v2119, 0.0
        %v2128 = vmax.f32 %v2120, 0.0
        %v2129 = vmax.f32 %v2121, 0.0
        %v2130 = vmax.f32 %v2122, 0.0
        %v2131 = vmax.f32 %v2123, 0.0
        %2132 = vst [vmem:[%s190] sm:$0xff] %v2124
        %2133 = vst [vmem:[%s190 + $0x8] sm:$0xff] %v2125
        %2134 = vst [vmem:[%s190 + $0x10] sm:$0xff] %v2126
        %2135 = vst [vmem:[%s190 + $0x18] sm:$0xff] %v2127
        %2136 = vst [vmem:[%s190 + $0x20] sm:$0xff] %v2128
        %2137 = vst [vmem:[%s190 + $0x28] sm:$0xff] %v2129
        %2138 = vst [vmem:[%s190 + $0x30] sm:$0xff] %v2130
        %2139 = vst [vmem:[%s190 + $0x38] sm:$0xff] %v2131
        %s2140 = sand.u32 %s115, 1
        %s2141 = scalar_lea.sflag [#allocation3], %s2140
        %s2142 = sand.u32 %s115, 1
        %s2143 = smul.addr %s2142, 64
        %s2144 = scalar_lea.vmem [#allocation2], %s2143
        // Predicated region
        $region37: #{tpu_custom_call.1} parent=35 // pred_check
          %p2145 = pneg %p125
        $region38: #{tpu_custom_call.1} parent=35 // pred_check_branch
          %2147 = sbr.rel (%p2145) target = $region40
        $region39: #{tpu_custom_call.1} parent=35 // pred_region
          %s2149 = ssub.s32 1024, 1024
          %2150 = vsyncadd %s2141, %s2149
          %s2151 = smul.addr %s18, 8
          %s2152 = smul.addr %s2151, 128
          %s2153 = scalar_lea.hbm %s4, %s2152
          %s2154 = sshll.u32 %s2144, 4
          %s2155 = int_to_ptr.vmem [resolvable:$true] %s2154
          %2160 = dma.vmem_to_hbm [thread:$0]  %s2155, 1024, %s2153, %s2141, 128, 128, 8
        $region40: #{tpu_custom_call.1} parent=35 // pred_fallthru
          _
      $region36: #{tpu_custom_call.1} parent=5 // pred_fallthru
        _
      %p2161 = scmp.le.s32.totalorder 2, %s13
      // Predicated region
      $region41: #{tpu_custom_call.1} parent=5 // pred_check
        %p2162 = pneg %p2161
      $region42: #{tpu_custom_call.1} parent=5 // pred_check_branch
        %2164 = sbr.rel (%p2162) target = $region44
      $region43: #{tpu_custom_call.1} parent=5 // pred_region
        %s2165 = ssub.s32 %s13, 2
        // Predicated region
        $region45: #{tpu_custom_call.1} parent=43 // pred_check
          %p2166 = pneg %p131
        $region46: #{tpu_custom_call.1} parent=43 // pred_check_branch
          %2168 = sbr.rel (%p2166) target = $region48
        $region47: #{tpu_custom_call.1} parent=43 // pred_region
          %s2169 = sand.u32 %s116, 1
          %s2170 = scalar_lea.sflag [#allocation3], %s2169
          %s2171 = sand.u32 %s116, 1
          %s2172 = smul.addr %s2171, 64
          %s2173 = scalar_lea.vmem [#allocation2], %s2172
          %2174 = dma.done %s2170, 1024
        $region48: #{tpu_custom_call.1} parent=43 // pred_fallthru
          _
      $region44: #{tpu_custom_call.1} parent=5 // pred_fallthru
        _
    $region6: #{tpu_custom_call.1} parent=1 // loop_footer
      %s17 = sadd.s32 1, %s13
    $region7: #{tpu_custom_call.1} parent=1 // loop_footer_branch
      %12 = sbr.rel target = $region3
    $region8: #{tpu_custom_call.1} parent=1 // loop_exit
      _
    %2175 = vsyncpa [#allocation3], 1
    %s2176 = scalar_lea.sflag [#allocation3], 1
    %2177 = vsyncpa %s2176, 1

</llo_original>
